<compile_context>
chip_gen: v7x
topology: tpu7x:2x2x1
jax: 0.10.0
libtpu: 0.0.40
codegen_flags: <defaults>
</compile_context>

<pallas_src>
import functools

import jax
import jax.numpy as jnp
from jax.experimental import pallas as pl
from jax.experimental.pallas import tpu as pltpu


def _encoder_gru_kernel(x_ref, w_ih_ref, b_i_ref, w_hh_ref, b_hn_ref,
                        w_head_ref, b_head_ref, out_ref,
                        gi_scr, h_scr, *, seq_len, chunk):
    """One (batch block, time chunk) grid step.

    Shapes: x_ref (chunk, BB, E) bf16, w_ih_ref (E, 3Hp) bf16, b_i_ref (1, 3Hp) f32,
    w_hh_ref (Hp, 3Hp) bf16, b_hn_ref (1, Hp) f32, w_head_ref (Hp, P) bf16,
    b_head_ref (1, P) f32, out_ref (BB, P) f32, gi_scr (chunk*BB, 3Hp) bf16 scratch,
    h_scr (BB, Hp) f32 scratch (carried hidden state across time chunks).
    """
    BB = out_ref.shape[0]
    Hp = w_hh_ref.shape[0]
    E = x_ref.shape[-1]
    c = pl.program_id(1)
    nc = pl.num_programs(1)

    # (Re)initialize the carried hidden state at the start of each batch block.
    @pl.when(c == 0)
    def _():
        h_scr[...] = jnp.zeros_like(h_scr)

    # Hoisted input projection for this chunk: one MXU matmul covering all `chunk`
    # steps.  Stored bf16; the gi + gh add happens in f32 at use.
    x = x_ref[...].reshape(chunk * BB, E)                       # (chunk*BB, E) bf16
    gi_scr[...] = (
        jnp.dot(x, w_ih_ref[...], preferred_element_type=jnp.float32)
        + b_i_ref[...]).astype(gi_scr.dtype)

    w_hh = w_hh_ref[...]                                   # (Hp, 3Hp) bf16, resident
    b_hn = jnp.broadcast_to(b_hn_ref[...], (BB, Hp))       # hoisted broadcast
    h0 = h_scr[...]                                        # (BB, Hp) f32

    # Whether the last chunk contains padded time steps (static).
    has_time_pad = ((seq_len + chunk - 1) // chunk) * chunk != seq_len

    # TODO(synk): hold w_hh in MXU weight staging registers across the recurrence
    # (pltpu.matmul_push_rhs once + matmul_acc_lhs / matmul_pop per step) to avoid
    # re-filling the systolic array with the loop-invariant RHS every step.
    def step(t, carry):
        h, h_b = carry                                      # f32 state + bf16 shadow
        row = pl.multiple_of(t * BB, BB)
        gi = gi_scr[pl.ds(row, BB), :].astype(jnp.float32)  # (BB, 3Hp)
        gh = jnp.dot(h_b, w_hh, preferred_element_type=jnp.float32)
        # PyTorch GRU gate order (r, z, n); r/z biases already folded into gi.
        r = jax.nn.sigmoid(gi[:, 0:Hp] + gh[:, 0:Hp])
        z = jax.nn.sigmoid(gi[:, Hp:2 * Hp] + gh[:, Hp:2 * Hp])
        n = jnp.tanh(gi[:, 2 * Hp:3 * Hp] + r * (gh[:, 2 * Hp:3 * Hp] + b_hn))
        h_new = (1.0 - z) * n + z * h
        if has_time_pad:
            valid = (c * chunk + t) < seq_len               # mask padded tail steps
            h_new = jnp.where(valid, h_new, h)
        return h_new, h_new.astype(w_hh.dtype)

    unroll = next(u for u in (8, 4, 2, 1) if chunk % u == 0)
    h_f, h_b = jax.lax.fori_loop(0, chunk, step, (h0, h0.astype(w_hh.dtype)),
                                 unroll=unroll)
    h_scr[...] = h_f

    # Fused mu | log_var head on the final chunk: single MXU push, lane-dense store.
    @pl.when(c == nc - 1)
    def _():
        out_ref[...] = (
            jnp.dot(h_b, w_head_ref[...], preferred_element_type=jnp.float32)
            + b_head_ref[...])


def _round_up(n, m):
    return ((n + m - 1) // m) * m


def encoder_rnn_forward(tokens, params, *, chunk=None, batch_block=None):
    """tokens: (S, B) int32 token ids (time-major, batch_first=False).

    Returns (mu, log_var), each (B, latent_dim) float32.
    """
    emb = params["embedding"]                  # (V, E)
    S, B = tokens.shape
    E = emb.shape[1]
    H = params["w_hh"].shape[1]
    L = params["w_mu"].shape[0]

    Bp = _round_up(B, 16)                      # bf16 sublane packing for gi slices
    Hp = _round_up(H, 128)                     # lane-align hidden dim (per gate)
    P = _round_up(2 * L, 128)                  # fused mu|log_var head width

    # Batch blocking (grid axis 0, "parallel").  Default: one block.  On v7x set
    # batch_block = Bp // 2 (multiple of 16) to split the work across both TCs.
    if batch_block is None:
        BB = Bp
    else:
        BB = _round_up(min(batch_block, Bp), 16)
        Bp = _round_up(Bp, BB)
    nb = Bp // BB

    # Time chunking (grid axis 1, "arbitrary" reduction over the recurrence).
    CH = min(S, 32) if chunk is None else max(1, min(chunk, S))
    nc = pl.cdiv(S, CH)
    S_pad = nc * CH

    f32, bf16 = jnp.float32, jnp.bfloat16

    def pad2(a, r, c):
        return jnp.pad(a, ((0, r - a.shape[0]), (0, c - a.shape[1])))

    def pad1(v, n):
        return jnp.pad(v, (0, n - v.shape[0]))

    # Embedding gather (XLA glue).  x keeps its true E in HBM; only batch/time are
    # padded (padded time steps are masked inside the kernel, padded batch rows are
    # sliced off at the end).
    # TODO(synk): fuse the embedding gather into the kernel (scalar-prefetch ids +
    # per-row DMA gather) to remove the extra HBM round trip of the activations.
    x = jnp.take(emb, tokens, axis=0).astype(f32)                 # (S, B, E)
    x = jnp.pad(x, ((0, S_pad - S), (0, Bp - B), (0, 0))).astype(bf16)

    # Gate-blocked, lane-padded GRU weights (PyTorch (3H, in) -> (in, 3H), gates r|z|n).
    w_ih_t = params["w_ih"].T.astype(f32)                         # (E, 3H)
    w_hh_t = params["w_hh"].T.astype(f32)                         # (H, 3H)
    w_ih_p = jnp.concatenate(
        [pad2(w_ih_t[:, g * H:(g + 1) * H], E, Hp) for g in range(3)],
        axis=1).astype(bf16)                                      # (E, 3Hp)
    w_hh_p = jnp.concatenate(
        [pad2(w_hh_t[:, g * H:(g + 1) * H], Hp, Hp) for g in range(3)],
        axis=1).astype(bf16)                                      # (Hp, 3Hp)

    b_ih = params["b_ih"].astype(f32)
    b_hh = params["b_hh"].astype(f32)
    # Fold b_hh into b_ih for r/z; b_hn must stay separate (inside the r*(...) term).
    b_i = jnp.concatenate([
        pad1(b_ih[0:H] + b_hh[0:H], Hp),
        pad1(b_ih[H:2 * H] + b_hh[H:2 * H], Hp),
        pad1(b_ih[2 * H:3 * H], Hp),
    ]).reshape(1, 3 * Hp)
    b_hn = pad1(b_hh[2 * H:3 * H], Hp).reshape(1, Hp)

    # Fused heads: columns [0:L] = mu, [L:2L] = log_var, rest zero (lane-dense store).
    w_head = jnp.zeros((Hp, P), f32)
    w_head = w_head.at[:H, 0:L].set(params["w_mu"].T.astype(f32))
    w_head = w_head.at[:H, L:2 * L].set(params["w_lv"].T.astype(f32))
    w_head = w_head.astype(bf16)
    b_head = jnp.zeros((1, P), f32)
    b_head = b_head.at[0, 0:L].set(params["b_mu"].astype(f32))
    b_head = b_head.at[0, L:2 * L].set(params["b_lv"].astype(f32))

    # VMEM footprint (double-buffered inputs + scratch + output), capped for v7x.
    est = (2 * CH * BB * E * 2                                    # x chunk (bf16, x2)
           + 2 * (E * 3 * Hp + Hp * 3 * Hp + Hp * P) * 2          # bf16 weights (x2)
           + 2 * (3 * Hp + Hp + P) * 4                            # f32 biases (x2)
           + 2 * BB * P * 4                                       # output (x2)
           + CH * BB * 3 * Hp * 2                                 # gi scratch (bf16)
           + BB * Hp * 4)                                         # h scratch (f32)
    vmem_limit = int(min(64 * 1024 * 1024, max(2 * est, 8 * 1024 * 1024)))

    resident = lambda a: pl.BlockSpec(a.shape, lambda b, c: (0,) * a.ndim)
    kernel = functools.partial(_encoder_gru_kernel, seq_len=S, chunk=CH)

    out = pl.pallas_call(
        kernel,
        out_shape=jax.ShapeDtypeStruct((Bp, P), f32),
        grid=(nb, nc),
        in_specs=[
            pl.BlockSpec((CH, BB, E), lambda b, c: (c, b, 0)),    # x: pipelined chunks
            resident(w_ih_p), resident(b_i),
            resident(w_hh_p), resident(b_hn),
            resident(w_head), resident(b_head),
        ],
        out_specs=pl.BlockSpec((BB, P), lambda b, c: (b, 0)),
        scratch_shapes=[
            pltpu.VMEM((CH * BB, 3 * Hp), jnp.bfloat16),          # per-chunk gi
            pltpu.VMEM((BB, Hp), jnp.float32),                    # carried hidden state
        ],
        compiler_params=pltpu.CompilerParams(
            dimension_semantics=("parallel", "arbitrary"),
            vmem_limit_bytes=vmem_limit),
    )(x, w_ih_p, b_i, w_hh_p, b_hn, w_head, b_head)

    mu = out[:B, 0:L]
    log_var = out[:B, L:2 * L]
    return mu, log_var


def _reference_forward(tokens, params):
    """Pure-JAX f32 reference mirroring torch semantics."""
    x = jnp.take(params["embedding"], tokens, axis=0).astype(jnp.float32)  # (S, B, E)
    H = params["w_hh"].shape[1]

    def step(h, x_t):
        gi = x_t @ params["w_ih"].T + params["b_ih"]
        gh = h @ params["w_hh"].T + params["b_hh"]
        i_r, i_z, i_n = gi[:, :H], gi[:, H:2 * H], gi[:, 2 * H:]
        h_r, h_z, h_n = gh[:, :H], gh[:, H:2 * H], gh[:, 2 * H:]
        r = jax.nn.sigmoid(i_r + h_r)
        z = jax.nn.sigmoid(i_z + h_z)
        n = jnp.tanh(i_n + r * h_n)
        return (1.0 - z) * n + z * h, None

    h0 = jnp.zeros((x.shape[1], H), jnp.float32)
    h_final, _ = jax.lax.scan(step, h0, x)
    mu = h_final @ params["w_mu"].T + params["b_mu"]
    log_var = h_final @ params["w_lv"].T + params["b_lv"]
    return mu, log_var


def _init_params(key, vocab, emb_dim, hidden_dim, latent_dim):
    ks = jax.random.split(key, 9)
    sH = 1.0 / jnp.sqrt(hidden_dim)
    sL = 1.0 / jnp.sqrt(hidden_dim)
    u = lambda k, shape, s: jax.random.uniform(k, shape, jnp.float32, -s, s)
    return {
        "embedding": jax.random.normal(ks[0], (vocab, emb_dim), jnp.float32),
        # PyTorch nn.GRU parameter shapes, gate order (r, z, n)
        "w_ih": u(ks[1], (3 * hidden_dim, emb_dim), sH),
        "w_hh": u(ks[2], (3 * hidden_dim, hidden_dim), sH),
        "b_ih": u(ks[3], (3 * hidden_dim,), sH),
        "b_hh": u(ks[4], (3 * hidden_dim,), sH),
        # nn.Linear(hidden_dim, latent_dim)
        "w_mu": u(ks[5], (latent_dim, hidden_dim), sL),
        "b_mu": u(ks[6], (latent_dim,), sL),
        "w_lv": u(ks[7], (latent_dim, hidden_dim), sL),
        "b_lv": u(ks[8], (latent_dim,), sL),
    }


if __name__ == "__main__":
    vocab, emb_dim, hidden_dim, latent_dim = 32, 16, 32, 8
    seq_len, batch = 8, 2

    key = jax.random.PRNGKey(0)
    k_par, k_tok = jax.random.split(key)
    params = _init_params(k_par, vocab, emb_dim, hidden_dim, latent_dim)
    tokens = jax.random.randint(k_tok, (seq_len, batch), 0, vocab, dtype=jnp.int32)

    mu, log_var = jax.jit(
        functools.partial(encoder_rnn_forward, params=params, chunk=4))(tokens)
    jax.block_until_ready((mu, log_var))

    mu_ref, lv_ref = _reference_forward(tokens, params)
    assert mu.shape == (batch, latent_dim) and log_var.shape == (batch, latent_dim)
    # bf16 MXU operands + bf16 gi storage vs f32 reference -> loosened, explicit tol.
    assert jnp.allclose(mu, mu_ref, atol=5e-2, rtol=5e-2), "mu mismatch vs reference"
    assert jnp.allclose(log_var, lv_ref, atol=5e-2, rtol=5e-2), "log_var mismatch vs reference"

    print("KERNEL_OK")
</pallas_src>

<mosaic_0001>
module attributes {stable_mosaic.version = 11 : i64} {
  func.func @_encoder_gru_kernel(%arg0: i32, %arg1: i32, %arg2: memref<4x16x16xbf16, #tpu.memory_space<vmem>>, %arg3: memref<16x384xbf16, #tpu.memory_space<vmem>>, %arg4: memref<1x384xf32, #tpu.memory_space<vmem>>, %arg5: memref<128x384xbf16, #tpu.memory_space<vmem>>, %arg6: memref<1x128xf32, #tpu.memory_space<vmem>>, %arg7: memref<128x128xbf16, #tpu.memory_space<vmem>>, %arg8: memref<1x128xf32, #tpu.memory_space<vmem>>, %arg9: memref<16x128xf32, #tpu.memory_space<vmem>>, %arg10: memref<64x384xbf16, #tpu.memory_space<vmem>>, %arg11: memref<16x128xf32, #tpu.memory_space<vmem>>) attributes {dimension_semantics = [#tpu.dimension_semantics<parallel>, #tpu.dimension_semantics<arbitrary>], iteration_bounds = array<i64: 1, 2>, scalar_prefetch = 0 : i64, scratch_operands = 2 : i64, tpu.core_type = #tpu.core_type<tc>, window_params = [{transform_indices = @transform_0, window_bounds = array<i64: 4, 16, 16>}, {pipeline_mode = #tpu.pipeline_mode<synchronous>, transform_indices = @transform_1, window_bounds = array<i64: 16, 384>}, {pipeline_mode = #tpu.pipeline_mode<synchronous>, transform_indices = @transform_2, window_bounds = array<i64: 1, 384>}, {pipeline_mode = #tpu.pipeline_mode<synchronous>, transform_indices = @transform_3, window_bounds = array<i64: 128, 384>}, {pipeline_mode = #tpu.pipeline_mode<synchronous>, transform_indices = @transform_4, window_bounds = array<i64: 1, 128>}, {pipeline_mode = #tpu.pipeline_mode<synchronous>, transform_indices = @transform_5, window_bounds = array<i64: 128, 128>}, {pipeline_mode = #tpu.pipeline_mode<synchronous>, transform_indices = @transform_6, window_bounds = array<i64: 1, 128>}, {transform_indices = @transform_7, window_bounds = array<i64: 16, 128>}]} {
    %c0_i32 = arith.constant 0 : i32
    %0 = arith.cmpi eq, %arg1, %c0_i32 : i32
    %1 = arith.extui %0 : i1 to i32
    %c0_i32_0 = arith.constant 0 : i32
    %2 = arith.cmpi ne, %1, %c0_i32_0 : i32
    scf.if %2 {
      %cst_43 = arith.constant 0.000000e+00 : f32
      %158 = vector.broadcast %cst_43 : f32 to vector<16x128xf32>
      %c0_44 = arith.constant 0 : index
      %c0_45 = arith.constant 0 : index
      %159 = vector.load %arg11[%c0_44, %c0_45] : memref<16x128xf32, #tpu.memory_space<vmem>>, vector<16x128xf32>
      tpu.vector_store %arg11[%c0_44, %c0_45], %158 {strides = array<i32>} : memref<16x128xf32, #tpu.memory_space<vmem>>, vector<16x128xf32>,
    } else {
    }
    %c0 = arith.constant 0 : index
    %c0_1 = arith.constant 0 : index
    %c0_2 = arith.constant 0 : index
    %3 = vector.load %arg2[%c0, %c0_1, %c0_2] : memref<4x16x16xbf16, #tpu.memory_space<vmem>>, vector<4x16x16xbf16>
    %4 = vector.shape_cast %3 : vector<4x16x16xbf16> to vector<64x16xbf16>
    %c0_3 = arith.constant 0 : index
    %c0_4 = arith.constant 0 : index
    %5 = vector.load %arg3[%c0_3, %c0_4] : memref<16x384xbf16, #tpu.memory_space<vmem>>, vector<16x384xbf16>
    %cst = arith.constant dense<0.000000e+00> : vector<64x384xf32>
    %6 = tpu.matmul %4, %5, %cst {dimension_numbers = #tpu.dot_dimension_numbers<[1], [0], [0], [1], [0, 0, 1, 1], [], []>} : vector<64x16xbf16>, vector<16x384xbf16>, vector<64x384xf32> -> vector<64x384xf32>
    %c0_5 = arith.constant 0 : index
    %c0_6 = arith.constant 0 : index
    %7 = vector.load %arg4[%c0_5, %c0_6] : memref<1x384xf32, #tpu.memory_space<vmem>>, vector<1x384xf32>
    %8 = vector.broadcast %7 : vector<1x384xf32> to vector<64x384xf32>
    %9 = arith.addf %6, %8 : vector<64x384xf32>
    %10 = arith.truncf %9 : vector<64x384xf32> to vector<64x384xbf16>
    %c0_7 = arith.constant 0 : index
    %c0_8 = arith.constant 0 : index
    %11 = vector.load %arg10[%c0_7, %c0_8] : memref<64x384xbf16, #tpu.memory_space<vmem>>, vector<64x384xbf16>
    tpu.vector_store %arg10[%c0_7, %c0_8], %10 {strides = array<i32>} : memref<64x384xbf16, #tpu.memory_space<vmem>>, vector<64x384xbf16>,
    %c0_9 = arith.constant 0 : index
    %c0_10 = arith.constant 0 : index
    %12 = vector.load %arg5[%c0_9, %c0_10] : memref<128x384xbf16, #tpu.memory_space<vmem>>, vector<128x384xbf16>
    %c0_11 = arith.constant 0 : index
    %c0_12 = arith.constant 0 : index
    %13 = vector.load %arg6[%c0_11, %c0_12] : memref<1x128xf32, #tpu.memory_space<vmem>>, vector<1x128xf32>
    %14 = vector.shape_cast %13 : vector<1x128xf32> to vector<1x128xf32>
    %15 = vector.broadcast %14 : vector<1x128xf32> to vector<16x128xf32>
    %c0_13 = arith.constant 0 : index
    %c0_14 = arith.constant 0 : index
    %16 = vector.load %arg11[%c0_13, %c0_14] : memref<16x128xf32, #tpu.memory_space<vmem>>, vector<16x128xf32>
    %17 = arith.truncf %16 : vector<16x128xf32> to vector<16x128xbf16>
    %c0_i32_15 = arith.constant 0 : i32
    %c16_i32 = arith.constant 16 : i32
    %18 = arith.muli %c0_i32_15, %c16_i32 : i32
    %19 = tpu.assume_multiple %18, 16 : i32
    %20 = arith.index_cast %19 : i32 to index
    %c0_16 = arith.constant 0 : index
    %21 = vector.load %arg10[%20, %c0_16] : memref<64x384xbf16, #tpu.memory_space<vmem>>, vector<16x384xbf16>
    %22 = arith.extf %21 : vector<16x384xbf16> to vector<16x384xf32>
    %cst_17 = arith.constant dense<0.000000e+00> : vector<16x384xf32>
    %23 = tpu.matmul %17, %12, %cst_17 {dimension_numbers = #tpu.dot_dimension_numbers<[1], [0], [0], [1], [0, 0, 1, 1], [], []>} : vector<16x128xbf16>, vector<128x384xbf16>, vector<16x384xf32> -> vector<16x384xf32>
    %24 = vector.extract_strided_slice %22 {offsets = [0, 0], sizes = [16, 128], strides = [1, 1]} : vector<16x384xf32> to vector<16x128xf32>
    %25 = vector.extract_strided_slice %23 {offsets = [0, 0], sizes = [16, 128], strides = [1, 1]} : vector<16x384xf32> to vector<16x128xf32>
    %26 = arith.addf %24, %25 : vector<16x128xf32>
    %27 = arith.negf %26 : vector<16x128xf32>
    %28 = math.exp %27 : vector<16x128xf32>
    %cst_18 = arith.constant 1.000000e+00 : f32
    %29 = vector.broadcast %cst_18 : f32 to vector<16x128xf32>
    %30 = arith.addf %29, %28 : vector<16x128xf32>
    %31 = arith.divf %29, %30 : vector<16x128xf32>
    %32 = vector.extract_strided_slice %22 {offsets = [0, 128], sizes = [16, 128], strides = [1, 1]} : vector<16x384xf32> to vector<16x128xf32>
    %33 = vector.extract_strided_slice %23 {offsets = [0, 128], sizes = [16, 128], strides = [1, 1]} : vector<16x384xf32> to vector<16x128xf32>
    %34 = arith.addf %32, %33 : vector<16x128xf32>
    %35 = arith.negf %34 : vector<16x128xf32>
    %36 = math.exp %35 : vector<16x128xf32>
    %cst_19 = arith.constant 1.000000e+00 : f32
    %37 = vector.broadcast %cst_19 : f32 to vector<16x128xf32>
    %38 = arith.addf %37, %36 : vector<16x128xf32>
    %39 = arith.divf %37, %38 : vector<16x128xf32>
    %40 = vector.extract_strided_slice %22 {offsets = [0, 256], sizes = [16, 128], strides = [1, 1]} : vector<16x384xf32> to vector<16x128xf32>
    %41 = vector.extract_strided_slice %23 {offsets = [0, 256], sizes = [16, 128], strides = [1, 1]} : vector<16x384xf32> to vector<16x128xf32>
    %42 = arith.addf %41, %15 : vector<16x128xf32>
    %43 = arith.mulf %31, %42 : vector<16x128xf32>
    %44 = arith.addf %40, %43 : vector<16x128xf32>
    %45 = math.tanh %44 : vector<16x128xf32>
    %cst_20 = arith.constant 1.000000e+00 : f32
    %46 = vector.broadcast %cst_20 : f32 to vector<16x128xf32>
    %47 = arith.subf %46, %39 : vector<16x128xf32>
    %48 = arith.mulf %47, %45 : vector<16x128xf32>
    %49 = arith.mulf %39, %16 : vector<16x128xf32>
    %50 = arith.addf %48, %49 : vector<16x128xf32>
    %51 = arith.truncf %50 : vector<16x128xf32> to vector<16x128xbf16>
    %c1_i32 = arith.constant 1 : i32
    %c16_i32_21 = arith.constant 16 : i32
    %52 = arith.muli %c1_i32, %c16_i32_21 : i32
    %53 = tpu.assume_multiple %52, 16 : i32
    %54 = arith.index_cast %53 : i32 to index
    %c0_22 = arith.constant 0 : index
    %55 = vector.load %arg10[%54, %c0_22] : memref<64x384xbf16, #tpu.memory_space<vmem>>, vector<16x384xbf16>
    %56 = arith.extf %55 : vector<16x384xbf16> to vector<16x384xf32>
    %cst_23 = arith.constant dense<0.000000e+00> : vector<16x384xf32>
    %57 = tpu.matmul %51, %12, %cst_23 {dimension_numbers = #tpu.dot_dimension_numbers<[1], [0], [0], [1], [0, 0, 1, 1], [], []>} : vector<16x128xbf16>, vector<128x384xbf16>, vector<16x384xf32> -> vector<16x384xf32>
    %58 = vector.extract_strided_slice %56 {offsets = [0, 0], sizes = [16, 128], strides = [1, 1]} : vector<16x384xf32> to vector<16x128xf32>
    %59 = vector.extract_strided_slice %57 {offsets = [0, 0], sizes = [16, 128], strides = [1, 1]} : vector<16x384xf32> to vector<16x128xf32>
    %60 = arith.addf %58, %59 : vector<16x128xf32>
    %61 = arith.negf %60 : vector<16x128xf32>
    %62 = math.exp %61 : vector<16x128xf32>
    %cst_24 = arith.constant 1.000000e+00 : f32
    %63 = vector.broadcast %cst_24 : f32 to vector<16x128xf32>
    %64 = arith.addf %63, %62 : vector<16x128xf32>
    %65 = arith.divf %63, %64 : vector<16x128xf32>
    %66 = vector.extract_strided_slice %56 {offsets = [0, 128], sizes = [16, 128], strides = [1, 1]} : vector<16x384xf32> to vector<16x128xf32>
    %67 = vector.extract_strided_slice %57 {offsets = [0, 128], sizes = [16, 128], strides = [1, 1]} : vector<16x384xf32> to vector<16x128xf32>
    %68 = arith.addf %66, %67 : vector<16x128xf32>
    %69 = arith.negf %68 : vector<16x128xf32>
    %70 = math.exp %69 : vector<16x128xf32>
    %cst_25 = arith.constant 1.000000e+00 : f32
    %71 = vector.broadcast %cst_25 : f32 to vector<16x128xf32>
    %72 = arith.addf %71, %70 : vector<16x128xf32>
    %73 = arith.divf %71, %72 : vector<16x128xf32>
    %74 = vector.extract_strided_slice %56 {offsets = [0, 256], sizes = [16, 128], strides = [1, 1]} : vector<16x384xf32> to vector<16x128xf32>
    %75 = vector.extract_strided_slice %57 {offsets = [0, 256], sizes = [16, 128], strides = [1, 1]} : vector<16x384xf32> to vector<16x128xf32>
    %76 = arith.addf %75, %15 : vector<16x128xf32>
    %77 = arith.mulf %65, %76 : vector<16x128xf32>
    %78 = arith.addf %74, %77 : vector<16x128xf32>
    %79 = math.tanh %78 : vector<16x128xf32>
    %cst_26 = arith.constant 1.000000e+00 : f32
    %80 = vector.broadcast %cst_26 : f32 to vector<16x128xf32>
    %81 = arith.subf %80, %73 : vector<16x128xf32>
    %82 = arith.mulf %81, %79 : vector<16x128xf32>
    %83 = arith.mulf %73, %50 : vector<16x128xf32>
    %84 = arith.addf %82, %83 : vector<16x128xf32>
    %85 = arith.truncf %84 : vector<16x128xf32> to vector<16x128xbf16>
    %c2_i32 = arith.constant 2 : i32
    %c16_i32_27 = arith.constant 16 : i32
    %86 = arith.muli %c2_i32, %c16_i32_27 : i32
    %87 = tpu.assume_multiple %86, 16 : i32
    %88 = arith.index_cast %87 : i32 to index
    %c0_28 = arith.constant 0 : index
    %89 = vector.load %arg10[%88, %c0_28] : memref<64x384xbf16, #tpu.memory_space<vmem>>, vector<16x384xbf16>
    %90 = arith.extf %89 : vector<16x384xbf16> to vector<16x384xf32>
    %cst_29 = arith.constant dense<0.000000e+00> : vector<16x384xf32>
    %91 = tpu.matmul %85, %12, %cst_29 {dimension_numbers = #tpu.dot_dimension_numbers<[1], [0], [0], [1], [0, 0, 1, 1], [], []>} : vector<16x128xbf16>, vector<128x384xbf16>, vector<16x384xf32> -> vector<16x384xf32>
    %92 = vector.extract_strided_slice %90 {offsets = [0, 0], sizes = [16, 128], strides = [1, 1]} : vector<16x384xf32> to vector<16x128xf32>
    %93 = vector.extract_strided_slice %91 {offsets = [0, 0], sizes = [16, 128], strides = [1, 1]} : vector<16x384xf32> to vector<16x128xf32>
    %94 = arith.addf %92, %93 : vector<16x128xf32>
    %95 = arith.negf %94 : vector<16x128xf32>
    %96 = math.exp %95 : vector<16x128xf32>
    %cst_30 = arith.constant 1.000000e+00 : f32
    %97 = vector.broadcast %cst_30 : f32 to vector<16x128xf32>
    %98 = arith.addf %97, %96 : vector<16x128xf32>
    %99 = arith.divf %97, %98 : vector<16x128xf32>
    %100 = vector.extract_strided_slice %90 {offsets = [0, 128], sizes = [16, 128], strides = [1, 1]} : vector<16x384xf32> to vector<16x128xf32>
    %101 = vector.extract_strided_slice %91 {offsets = [0, 128], sizes = [16, 128], strides = [1, 1]} : vector<16x384xf32> to vector<16x128xf32>
    %102 = arith.addf %100, %101 : vector<16x128xf32>
    %103 = arith.negf %102 : vector<16x128xf32>
    %104 = math.exp %103 : vector<16x128xf32>
    %cst_31 = arith.constant 1.000000e+00 : f32
    %105 = vector.broadcast %cst_31 : f32 to vector<16x128xf32>
    %106 = arith.addf %105, %104 : vector<16x128xf32>
    %107 = arith.divf %105, %106 : vector<16x128xf32>
    %108 = vector.extract_strided_slice %90 {offsets = [0, 256], sizes = [16, 128], strides = [1, 1]} : vector<16x384xf32> to vector<16x128xf32>
    %109 = vector.extract_strided_slice %91 {offsets = [0, 256], sizes = [16, 128], strides = [1, 1]} : vector<16x384xf32> to vector<16x128xf32>
    %110 = arith.addf %109, %15 : vector<16x128xf32>
    %111 = arith.mulf %99, %110 : vector<16x128xf32>
    %112 = arith.addf %108, %111 : vector<16x128xf32>
    %113 = math.tanh %112 : vector<16x128xf32>
    %cst_32 = arith.constant 1.000000e+00 : f32
    %114 = vector.broadcast %cst_32 : f32 to vector<16x128xf32>
    %115 = arith.subf %114, %107 : vector<16x128xf32>
    %116 = arith.mulf %115, %113 : vector<16x128xf32>
    %117 = arith.mulf %107, %84 : vector<16x128xf32>
    %118 = arith.addf %116, %117 : vector<16x128xf32>
    %119 = arith.truncf %118 : vector<16x128xf32> to vector<16x128xbf16>
    %c3_i32 = arith.constant 3 : i32
    %c16_i32_33 = arith.constant 16 : i32
    %120 = arith.muli %c3_i32, %c16_i32_33 : i32
    %121 = tpu.assume_multiple %120, 16 : i32
    %122 = arith.index_cast %121 : i32 to index
    %c0_34 = arith.constant 0 : index
    %123 = vector.load %arg10[%122, %c0_34] : memref<64x384xbf16, #tpu.memory_space<vmem>>, vector<16x384xbf16>
    %124 = arith.extf %123 : vector<16x384xbf16> to vector<16x384xf32>
    %cst_35 = arith.constant dense<0.000000e+00> : vector<16x384xf32>
    %125 = tpu.matmul %119, %12, %cst_35 {dimension_numbers = #tpu.dot_dimension_numbers<[1], [0], [0], [1], [0, 0, 1, 1], [], []>} : vector<16x128xbf16>, vector<128x384xbf16>, vector<16x384xf32> -> vector<16x384xf32>
    %126 = vector.extract_strided_slice %124 {offsets = [0, 0], sizes = [16, 128], strides = [1, 1]} : vector<16x384xf32> to vector<16x128xf32>
    %127 = vector.extract_strided_slice %125 {offsets = [0, 0], sizes = [16, 128], strides = [1, 1]} : vector<16x384xf32> to vector<16x128xf32>
    %128 = arith.addf %126, %127 : vector<16x128xf32>
    %129 = arith.negf %128 : vector<16x128xf32>
    %130 = math.exp %129 : vector<16x128xf32>
    %cst_36 = arith.constant 1.000000e+00 : f32
    %131 = vector.broadcast %cst_36 : f32 to vector<16x128xf32>
    %132 = arith.addf %131, %130 : vector<16x128xf32>
    %133 = arith.divf %131, %132 : vector<16x128xf32>
    %134 = vector.extract_strided_slice %124 {offsets = [0, 128], sizes = [16, 128], strides = [1, 1]} : vector<16x384xf32> to vector<16x128xf32>
    %135 = vector.extract_strided_slice %125 {offsets = [0, 128], sizes = [16, 128], strides = [1, 1]} : vector<16x384xf32> to vector<16x128xf32>
    %136 = arith.addf %134, %135 : vector<16x128xf32>
    %137 = arith.negf %136 : vector<16x128xf32>
    %138 = math.exp %137 : vector<16x128xf32>
    %cst_37 = arith.constant 1.000000e+00 : f32
    %139 = vector.broadcast %cst_37 : f32 to vector<16x128xf32>
    %140 = arith.addf %139, %138 : vector<16x128xf32>
    %141 = arith.divf %139, %140 : vector<16x128xf32>
    %142 = vector.extract_strided_slice %124 {offsets = [0, 256], sizes = [16, 128], strides = [1, 1]} : vector<16x384xf32> to vector<16x128xf32>
    %143 = vector.extract_strided_slice %125 {offsets = [0, 256], sizes = [16, 128], strides = [1, 1]} : vector<16x384xf32> to vector<16x128xf32>
    %144 = arith.addf %143, %15 : vector<16x128xf32>
    %145 = arith.mulf %133, %144 : vector<16x128xf32>
    %146 = arith.addf %142, %145 : vector<16x128xf32>
    %147 = math.tanh %146 : vector<16x128xf32>
    %cst_38 = arith.constant 1.000000e+00 : f32
    %148 = vector.broadcast %cst_38 : f32 to vector<16x128xf32>
    %149 = arith.subf %148, %141 : vector<16x128xf32>
    %150 = arith.mulf %149, %147 : vector<16x128xf32>
    %151 = arith.mulf %141, %118 : vector<16x128xf32>
    %152 = arith.addf %150, %151 : vector<16x128xf32>
    %153 = arith.truncf %152 : vector<16x128xf32> to vector<16x128xbf16>
    %c4_i32 = arith.constant 4 : i32
    %c0_39 = arith.constant 0 : index
    %c0_40 = arith.constant 0 : index
    %154 = vector.load %arg11[%c0_39, %c0_40] : memref<16x128xf32, #tpu.memory_space<vmem>>, vector<16x128xf32>
    tpu.vector_store %arg11[%c0_39, %c0_40], %152 {strides = array<i32>} : memref<16x128xf32, #tpu.memory_space<vmem>>, vector<16x128xf32>,
    %c1_i32_41 = arith.constant 1 : i32
    %155 = arith.cmpi eq, %arg1, %c1_i32_41 : i32
    %156 = arith.extui %155 : i1 to i32
    %c0_i32_42 = arith.constant 0 : i32
    %157 = arith.cmpi ne, %156, %c0_i32_42 : i32
    scf.if %157 {
      %c0_43 = arith.constant 0 : index
      %c0_44 = arith.constant 0 : index
      %158 = vector.load %arg7[%c0_43, %c0_44] : memref<128x128xbf16, #tpu.memory_space<vmem>>, vector<128x128xbf16>
      %cst_45 = arith.constant dense<0.000000e+00> : vector<16x128xf32>
      %159 = tpu.matmul %153, %158, %cst_45 {dimension_numbers = #tpu.dot_dimension_numbers<[1], [0], [0], [1], [0, 0, 1, 1], [], []>} : vector<16x128xbf16>, vector<128x128xbf16>, vector<16x128xf32> -> vector<16x128xf32>
      %c0_46 = arith.constant 0 : index
      %c0_47 = arith.constant 0 : index
      %160 = vector.load %arg8[%c0_46, %c0_47] : memref<1x128xf32, #tpu.memory_space<vmem>>, vector<1x128xf32>
      %161 = vector.broadcast %160 : vector<1x128xf32> to vector<16x128xf32>
      %162 = arith.addf %159, %161 : vector<16x128xf32>
      %c0_48 = arith.constant 0 : index
      %c0_49 = arith.constant 0 : index
      %163 = vector.load %arg9[%c0_48, %c0_49] : memref<16x128xf32, #tpu.memory_space<vmem>>, vector<16x128xf32>
      tpu.vector_store %arg9[%c0_48, %c0_49], %162 {strides = array<i32>} : memref<16x128xf32, #tpu.memory_space<vmem>>, vector<16x128xf32>,
    } else {
    }
    return
  }
  func.func @transform_0(%arg0: i32, %arg1: i32) -> (i32, i32, i32) {
    %c0_i32 = arith.constant 0 : i32
    %c0_i32_0 = arith.constant 0 : i32
    return %arg1, %arg0, %c0_i32 : i32, i32, i32
  }
  func.func @transform_1(%arg0: i32, %arg1: i32) -> (i32, i32) {
    %c0_i32 = arith.constant 0 : i32
    %c0_i32_0 = arith.constant 0 : i32
    %c0_i32_1 = arith.constant 0 : i32
    return %c0_i32, %c0_i32_0 : i32, i32
  }
  func.func @transform_2(%arg0: i32, %arg1: i32) -> (i32, i32) {
    %c0_i32 = arith.constant 0 : i32
    %c0_i32_0 = arith.constant 0 : i32
    %c0_i32_1 = arith.constant 0 : i32
    return %c0_i32, %c0_i32_0 : i32, i32
  }
  func.func @transform_3(%arg0: i32, %arg1: i32) -> (i32, i32) {
    %c0_i32 = arith.constant 0 : i32
    %c0_i32_0 = arith.constant 0 : i32
    %c0_i32_1 = arith.constant 0 : i32
    return %c0_i32, %c0_i32_0 : i32, i32
  }
  func.func @transform_4(%arg0: i32, %arg1: i32) -> (i32, i32) {
    %c0_i32 = arith.constant 0 : i32
    %c0_i32_0 = arith.constant 0 : i32
    %c0_i32_1 = arith.constant 0 : i32
    return %c0_i32, %c0_i32_0 : i32, i32
  }
  func.func @transform_5(%arg0: i32, %arg1: i32) -> (i32, i32) {
    %c0_i32 = arith.constant 0 : i32
    %c0_i32_0 = arith.constant 0 : i32
    %c0_i32_1 = arith.constant 0 : i32
    return %c0_i32, %c0_i32_0 : i32, i32
  }
  func.func @transform_6(%arg0: i32, %arg1: i32) -> (i32, i32) {
    %c0_i32 = arith.constant 0 : i32
    %c0_i32_0 = arith.constant 0 : i32
    %c0_i32_1 = arith.constant 0 : i32
    return %c0_i32, %c0_i32_0 : i32, i32
  }
  func.func @transform_7(%arg0: i32, %arg1: i32) -> (i32, i32) {
    %c0_i32 = arith.constant 0 : i32
    %c0_i32_0 = arith.constant 0 : i32
    return %arg0, %c0_i32 : i32, i32
  }
}

</mosaic_0001>

<llo_original>
// kernel: encoder_rnn_forward.1
$region0: #{encoder_rnn_forward.1}
  #allocation0 [shape = 'u32[]', space=smem, size = 0x4, offset = 0x4, fixed_abs, tag = 'smem constant byte address 0x4 - core index']
  #allocation1 [shape = 'u32[144,128]{1,0:T(1,128)}', space=vmem, size = 0x12000, scoped, tag = 'internal scratch']
  #allocation2 [shape = 'bf16[64,384]{1,0:T(16,128)(2,1)}', space=vmem, size = 0xc000, scoped, tag = 'scratch operand']
  #allocation3 [shape = 'f32[16,128]{1,0:T(8,128)}', space=vmem, size = 0x2000, scoped, tag = 'scratch operand']
  %s0 = inlined_call_operand.vmem [shape: bf16[8,16,16], index: 0, kind: input, shape index: {}]
  %s1 = inlined_call_operand.vmem [shape: bf16[16,384], index: 1, kind: input, shape index: {}]
  %s2 = inlined_call_operand.vmem [shape: f32[1,384], index: 2, kind: input, shape index: {}]
  %s3 = inlined_call_operand.vmem [shape: bf16[128,384], index: 3, kind: input, shape index: {}]
  %s4 = inlined_call_operand.vmem [shape: f32[1,128], index: 4, kind: input, shape index: {}]
  %s5 = inlined_call_operand.vmem [shape: bf16[128,128], index: 5, kind: input, shape index: {}]
  %s6 = inlined_call_operand.vmem [shape: f32[1,128], index: 6, kind: input, shape index: {}]
  %s7 = inlined_call_operand.vmem [shape: f32[16,128], index: 7, kind: output, shape index: {}]
  %s8 = sld [smem:[#allocation0]]
  $region69: #{encoder_rnn_forward.1} parent=0
    _
  %s10 = ssub.s32 1, %s8
  %s11 = scalar_select 0, %s10, %s8
  loop: start=0, step=1, limit=4
  $region2: #{encoder_rnn_forward.1} parent=0 // loop_pre_header
    _
  $region3: #{encoder_rnn_forward.1} parent=0 // loop_header
    %s13 = sphi 0, %s17
    %p14 = scmp.ge.s32.totalorder %s13, 4
    %s20 = sphi 0, %s32
    %s21 = sphi 0, %s28
    %s22 = sphi 0, %s20
    %s23 = sphi 0, %s21
    %s24 = sphi 0, %s22
    %s25 = sphi 0, %s23
    %s37 = sphi 0, %s39
    %s40 = sphi 0, %s37
    %s41 = sphi 0, %s40
    %s57 = sphi 0, %s41
    %s61 = sphi 0, %s61
    %s63 = sphi 0, %s61
    %s64 = sphi 0, %s63
    %s78 = sphi 0, %s64
    %s82 = sphi 0, %s82
    %s84 = sphi 0, %s82
    %s85 = sphi 0, %s84
    %s99 = sphi 0, %s85
    %s103 = sphi 0, %s103
    %s105 = sphi 0, %s103
    %s106 = sphi 0, %s105
    %s120 = sphi 0, %s106
    %s124 = sphi 0, %s124
    %s126 = sphi 0, %s124
    %s127 = sphi 0, %s126
    %s141 = sphi 0, %s127
    %s145 = sphi 0, %s145
    %s147 = sphi 0, %s145
    %s148 = sphi 0, %s147
    %s162 = sphi 0, %s148
    %s166 = sphi 0, %s166
    %s168 = sphi 0, %s166
    %s169 = sphi 0, %s168
    %s183 = sphi 0, %s169
    %s189 = sphi 0, %s191
    %s192 = sphi 0, %s189
    %s193 = sphi 0, %s192
    %s209 = sphi 0, %s193
  $region4: #{encoder_rnn_forward.1} parent=0 // loop_header_branch
    %16 = sbr.rel (%p14) target = $region8
  $region5: #{encoder_rnn_forward.1} parent=0 // loop_body
    %s18 = ssub.s32 %s13, 1
    %s19 = ssub.s32 %s13, 2
    %s26 = sadd.s32 1, %s21
    %p27 = scmp.ge.s32.totalorder %s26, 2
    %s28 = scalar_select %p27, 0, %s26
    %s29 = sadd.s32 1, %s20
    %s30 = scalar_select %p27, %s29, %s20
    %p31 = scmp.ge.s32.totalorder %s30, 1
    %s32 = scalar_select %p31, 0, %s30
    %s33 = ssub.s32 %s21, %s28
    %s34 = ssub.s32 %s20, %s32
    %s35 = sor.u32 %s33, %s34
    %p36 = scmp.eq.s32.totalorder %s35, 0
    %s38 = sadd.s32 %s37, 1
    %s39 = scalar_select %p36, %s37, %s38
    %p42 = pneg %p36
    %p43 = scmp.eq.s32.totalorder %s13, 1
    %p44 = por %p42, %p43
    %p45 = scmp.ne.s32.totalorder %s37, %s40
    %p46 = scmp.eq.s32.totalorder %s13, 0
    %p47 = por %p45, %p46
    %p48 = scmp.ne.s32.totalorder %s37, %s40
    %p49 = scmp.eq.s32.totalorder %s18, 1
    %p50 = por %p48, %p49
    %p51 = scmp.ne.s32.totalorder %s40, %s41
    %p52 = scmp.eq.s32.totalorder %s18, 0
    %p53 = por %p51, %p52
    %p54 = scmp.ne.s32.totalorder %s40, %s41
    %p55 = scmp.eq.s32.totalorder %s19, 1
    %p56 = por %p54, %p55
    %p58 = scmp.ne.s32.totalorder %s41, %s57
    %p59 = scmp.eq.s32.totalorder %s19, 0
    %p60 = por %p58, %p59
    %s62 = sadd.s32 %s61, 1
    %p65 = scmp.eq.s32.totalorder %s13, 1
    %p66 = scmp.ne.s32.totalorder %s61, %s63
    %p67 = scmp.eq.s32.totalorder %s13, 0
    %p68 = por %p66, %p67
    %p69 = scmp.ne.s32.totalorder %s61, %s63
    %p70 = scmp.eq.s32.totalorder %s18, 1
    %p71 = por %p69, %p70
    %p72 = scmp.ne.s32.totalorder %s63, %s64
    %p73 = scmp.eq.s32.totalorder %s18, 0
    %p74 = por %p72, %p73
    %p75 = scmp.ne.s32.totalorder %s63, %s64
    %p76 = scmp.eq.s32.totalorder %s19, 1
    %p77 = por %p75, %p76
    %p79 = scmp.ne.s32.totalorder %s64, %s78
    %p80 = scmp.eq.s32.totalorder %s19, 0
    %p81 = por %p79, %p80
    %s83 = sadd.s32 %s82, 1
    %p86 = scmp.eq.s32.totalorder %s13, 1
    %p87 = scmp.ne.s32.totalorder %s82, %s84
    %p88 = scmp.eq.s32.totalorder %s13, 0
    %p89 = por %p87, %p88
    %p90 = scmp.ne.s32.totalorder %s82, %s84
    %p91 = scmp.eq.s32.totalorder %s18, 1
    %p92 = por %p90, %p91
    %p93 = scmp.ne.s32.totalorder %s84, %s85
    %p94 = scmp.eq.s32.totalorder %s18, 0
    %p95 = por %p93, %p94
    %p96 = scmp.ne.s32.totalorder %s84, %s85
    %p97 = scmp.eq.s32.totalorder %s19, 1
    %p98 = por %p96, %p97
    %p100 = scmp.ne.s32.totalorder %s85, %s99
    %p101 = scmp.eq.s32.totalorder %s19, 0
    %p102 = por %p100, %p101
    %s104 = sadd.s32 %s103, 1
    %p107 = scmp.eq.s32.totalorder %s13, 1
    %p108 = scmp.ne.s32.totalorder %s103, %s105
    %p109 = scmp.eq.s32.totalorder %s13, 0
    %p110 = por %p108, %p109
    %p111 = scmp.ne.s32.totalorder %s103, %s105
    %p112 = scmp.eq.s32.totalorder %s18, 1
    %p113 = por %p111, %p112
    %p114 = scmp.ne.s32.totalorder %s105, %s106
    %p115 = scmp.eq.s32.totalorder %s18, 0
    %p116 = por %p114, %p115
    %p117 = scmp.ne.s32.totalorder %s105, %s106
    %p118 = scmp.eq.s32.totalorder %s19, 1
    %p119 = por %p117, %p118
    %p121 = scmp.ne.s32.totalorder %s106, %s120
    %p122 = scmp.eq.s32.totalorder %s19, 0
    %p123 = por %p121, %p122
    %s125 = sadd.s32 %s124, 1
    %p128 = scmp.eq.s32.totalorder %s13, 1
    %p129 = scmp.ne.s32.totalorder %s124, %s126
    %p130 = scmp.eq.s32.totalorder %s13, 0
    %p131 = por %p129, %p130
    %p132 = scmp.ne.s32.totalorder %s124, %s126
    %p133 = scmp.eq.s32.totalorder %s18, 1
    %p134 = por %p132, %p133
    %p135 = scmp.ne.s32.totalorder %s126, %s127
    %p136 = scmp.eq.s32.totalorder %s18, 0
    %p137 = por %p135, %p136
    %p138 = scmp.ne.s32.totalorder %s126, %s127
    %p139 = scmp.eq.s32.totalorder %s19, 1
    %p140 = por %p138, %p139
    %p142 = scmp.ne.s32.totalorder %s127, %s141
    %p143 = scmp.eq.s32.totalorder %s19, 0
    %p144 = por %p142, %p143
    %s146 = sadd.s32 %s145, 1
    %p149 = scmp.eq.s32.totalorder %s13, 1
    %p150 = scmp.ne.s32.totalorder %s145, %s147
    %p151 = scmp.eq.s32.totalorder %s13, 0
    %p152 = por %p150, %p151
    %p153 = scmp.ne.s32.totalorder %s145, %s147
    %p154 = scmp.eq.s32.totalorder %s18, 1
    %p155 = por %p153, %p154
    %p156 = scmp.ne.s32.totalorder %s147, %s148
    %p157 = scmp.eq.s32.totalorder %s18, 0
    %p158 = por %p156, %p157
    %p159 = scmp.ne.s32.totalorder %s147, %s148
    %p160 = scmp.eq.s32.totalorder %s19, 1
    %p161 = por %p159, %p160
    %p163 = scmp.ne.s32.totalorder %s148, %s162
    %p164 = scmp.eq.s32.totalorder %s19, 0
    %p165 = por %p163, %p164
    %s167 = sadd.s32 %s166, 1
    %p170 = scmp.eq.s32.totalorder %s13, 1
    %p171 = scmp.ne.s32.totalorder %s166, %s168
    %p172 = scmp.eq.s32.totalorder %s13, 0
    %p173 = por %p171, %p172
    %p174 = scmp.ne.s32.totalorder %s166, %s168
    %p175 = scmp.eq.s32.totalorder %s18, 1
    %p176 = por %p174, %p175
    %p177 = scmp.ne.s32.totalorder %s168, %s169
    %p178 = scmp.eq.s32.totalorder %s18, 0
    %p179 = por %p177, %p178
    %p180 = scmp.ne.s32.totalorder %s168, %s169
    %p181 = scmp.eq.s32.totalorder %s19, 1
    %p182 = por %p180, %p181
    %p184 = scmp.ne.s32.totalorder %s169, %s183
    %p185 = scmp.eq.s32.totalorder %s19, 0
    %p186 = por %p184, %p185
    %s187 = ssub.s32 %s20, %s32
    %p188 = scmp.eq.s32.totalorder %s187, 0
    %s190 = sadd.s32 %s189, 1
    %s191 = scalar_select %p188, %s189, %s190
    %p194 = pneg %p188
    %p195 = scmp.eq.s32.totalorder %s13, 1
    %p196 = por %p194, %p195
    %p197 = scmp.ne.s32.totalorder %s189, %s192
    %p198 = scmp.eq.s32.totalorder %s13, 0
    %p199 = por %p197, %p198
    %p200 = scmp.ne.s32.totalorder %s189, %s192
    %p201 = scmp.eq.s32.totalorder %s18, 1
    %p202 = por %p200, %p201
    %p203 = scmp.ne.s32.totalorder %s192, %s193
    %p204 = scmp.eq.s32.totalorder %s18, 0
    %p205 = por %p203, %p204
    %p206 = scmp.ne.s32.totalorder %s192, %s193
    %p207 = scmp.eq.s32.totalorder %s19, 1
    %p208 = por %p206, %p207
    %p210 = scmp.ne.s32.totalorder %s193, %s209
    %p211 = scmp.eq.s32.totalorder %s19, 0
    %p212 = por %p210, %p211
    %p213 = scmp.le.s32.totalorder 1, %s13
    %p214 = scmp.lt.s32.totalorder %s13, 3
    %p215 = pnand %p213, %p214
    %p216 = pneg %p215
    // Predicated region
    $region9: #{encoder_rnn_forward.1} parent=5 // pred_check
      _
    $region10: #{encoder_rnn_forward.1} parent=5 // pred_check_branch
      %218 = sbr.rel (%p215) target = $region12
    $region11: #{encoder_rnn_forward.1} parent=5 // pred_region
      %s219 = ssub.s32 %s13, 1
      // Predicated region
      $region13: #{encoder_rnn_forward.1} parent=11 // pred_check
        %p220 = pneg %p74
      $region14: #{encoder_rnn_forward.1} parent=11 // pred_check_branch
        %222 = sbr.rel (%p220) target = $region16
      $region15: #{encoder_rnn_forward.1} parent=11 // pred_region
        _
      $region16: #{encoder_rnn_forward.1} parent=11 // pred_fallthru
        _
      // Predicated region
      $region17: #{encoder_rnn_forward.1} parent=11 // pred_check
        %p223 = pneg %p95
      $region18: #{encoder_rnn_forward.1} parent=11 // pred_check_branch
        %225 = sbr.rel (%p223) target = $region20
      $region19: #{encoder_rnn_forward.1} parent=11 // pred_region
        _
      $region20: #{encoder_rnn_forward.1} parent=11 // pred_fallthru
        _
      // Predicated region
      $region21: #{encoder_rnn_forward.1} parent=11 // pred_check
        %p226 = pneg %p116
      $region22: #{encoder_rnn_forward.1} parent=11 // pred_check_branch
        %228 = sbr.rel (%p226) target = $region24
      $region23: #{encoder_rnn_forward.1} parent=11 // pred_region
        _
      $region24: #{encoder_rnn_forward.1} parent=11 // pred_fallthru
        _
      // Predicated region
      $region25: #{encoder_rnn_forward.1} parent=11 // pred_check
        %p229 = pneg %p137
      $region26: #{encoder_rnn_forward.1} parent=11 // pred_check_branch
        %231 = sbr.rel (%p229) target = $region28
      $region27: #{encoder_rnn_forward.1} parent=11 // pred_region
        _
      $region28: #{encoder_rnn_forward.1} parent=11 // pred_fallthru
        _
      // Predicated region
      $region29: #{encoder_rnn_forward.1} parent=11 // pred_check
        %p232 = pneg %p158
      $region30: #{encoder_rnn_forward.1} parent=11 // pred_check_branch
        %234 = sbr.rel (%p232) target = $region32
      $region31: #{encoder_rnn_forward.1} parent=11 // pred_region
        _
      $region32: #{encoder_rnn_forward.1} parent=11 // pred_fallthru
        _
      // Predicated region
      $region33: #{encoder_rnn_forward.1} parent=11 // pred_check
        %p235 = pneg %p179
      $region34: #{encoder_rnn_forward.1} parent=11 // pred_check_branch
        %237 = sbr.rel (%p235) target = $region36
      $region35: #{encoder_rnn_forward.1} parent=11 // pred_region
        _
      $region36: #{encoder_rnn_forward.1} parent=11 // pred_fallthru
        _
    $region12: #{encoder_rnn_forward.1} parent=5 // pred_fallthru
      _
    %p238 = scmp.lt.s32.totalorder %s13, 2
    // Predicated region
    $region37: #{encoder_rnn_forward.1} parent=5 // pred_check
      %p239 = pneg %p238
    $region38: #{encoder_rnn_forward.1} parent=5 // pred_check_branch
      %241 = sbr.rel (%p239) target = $region40
    $region39: #{encoder_rnn_forward.1} parent=5 // pred_region
      // Predicated region
      $region41: #{encoder_rnn_forward.1} parent=39 // pred_check
        %p242 = pneg %p47
      $region42: #{encoder_rnn_forward.1} parent=39 // pred_check_branch
        %244 = sbr.rel (%p242) target = $region44
      $region43: #{encoder_rnn_forward.1} parent=39 // pred_region
        %s245 = smul.u32 4, %s21
        %s246 = smul.u32 2, %s20
        %p247 = scmp.lt.s32.totalorder %s245, 7
        %s248 = scalar_select %p247, %s245, 7
        %p249 = scmp.lt.s32.totalorder %s246, 1
        %s250 = scalar_select %p249, %s246, 1
        %s251 = smul.addr %s248, 2
        %s252 = sadd.s32 %s250, %s251
        %s253 = smul.addr %s252, 4
        %s254 = scalar_lea.vmem %s0, %s253
        %s255 = smul.u32 4, %s21
        %s256 = smul.u32 2, %s20
      $region44: #{encoder_rnn_forward.1} parent=39 // pred_fallthru
        _
    $region40: #{encoder_rnn_forward.1} parent=5 // pred_fallthru
      _
    %p257 = scmp.le.s32.totalorder 1, %s13
    %p258 = scmp.lt.s32.totalorder %s13, 3
    %p259 = pnand %p257, %p258
    %p260 = pneg %p259
    // Predicated region
    $region45: #{encoder_rnn_forward.1} parent=5 // pred_check
      _
    $region46: #{encoder_rnn_forward.1} parent=5 // pred_check_branch
      %262 = sbr.rel (%p259) target = $region48
    $region47: #{encoder_rnn_forward.1} parent=5 // pred_region
      %s263 = ssub.s32 %s13, 1
      %s264 = smul.u32 4, %s23
      %s265 = smul.u32 2, %s22
      %p266 = scmp.lt.s32.totalorder %s264, 7
      %s267 = scalar_select %p266, %s264, 7
      %p268 = scmp.lt.s32.totalorder %s265, 1
      %s269 = scalar_select %p268, %s265, 1
      %s270 = smul.addr %s267, 2
      %s271 = sadd.s32 %s269, %s270
      %s272 = smul.addr %s271, 4
      %s273 = scalar_lea.vmem %s0, %s272
      %p274 = pneg %p53
      %p275 = pneg %p50
      %p276 = pneg %p74
      %p277 = pneg %p71
      %p278 = pneg %p95
      %p279 = pneg %p92
      %p280 = pneg %p116
      %p281 = pneg %p113
      %p282 = pneg %p137
      %p283 = pneg %p134
      %p284 = pneg %p158
      %p285 = pneg %p155
      %p286 = pneg %p179
      %p287 = pneg %p176
      %p288 = pneg %p205
      %p289 = pneg %p202
      %s290 = smul.u32 2, %s22
      %p291 = scmp.lt.s32.totalorder %s290, 1
      %s292 = scalar_select %p291, %s290, 1
      %s293 = smul.addr %s292, 8
      %s294 = scalar_lea.vmem %s7, %s293
      %s295 = smul.u32 4, %s23
      %s296 = smul.u32 2, %s22
      %p297 = scmp.lt.s32.totalorder %s295, 7
      %s298 = scalar_select %p297, %s295, 7
      %p299 = scmp.lt.s32.totalorder %s296, 1
      %s300 = scalar_select %p299, %s296, 1
      %s301 = smul.addr %s298, 2
      %s302 = sadd.s32 %s300, %s301
      %s303 = smul.addr %s302, 4
      %s304 = scalar_lea.vmem %s0, %s303
      %s305 = smul.u32 4, %s23
      %s306 = smul.u32 2, %s22
      %s307 = smul.u32 2, %s22
      %p308 = scmp.lt.s32.totalorder %s307, 1
      %s309 = scalar_select %p308, %s307, 1
      %s310 = smul.addr %s309, 8
      %s311 = scalar_lea.vmem %s7, %s310
      %s312 = smul.u32 2, %s22
      %p314 = scmp.eq.s32.totalorder %s23, 0
      // Predicated region
      $region49: #{encoder_rnn_forward.1} parent=47 // pred_check
        %p315 = pneg %p314
      $region50: #{encoder_rnn_forward.1} parent=47 // pred_check_branch
        %317 = sbr.rel (%p315) target = $region52
      $region51: #{encoder_rnn_forward.1} parent=47 // pred_region
        %318 = vst [vmem:[#allocation3] sm:$0xff] 0.0
        %319 = vst [vmem:[#allocation3 + $0x8] sm:$0xff] 0.0
      $region52: #{encoder_rnn_forward.1} parent=47 // pred_fallthru
        _
      %v320 = vld [vmem:[%s304] sm:$0xf]
      %v321 = vld [vmem:[%s304 + $0x4] sm:$0xf]
      %v322 = vld [vmem:[%s304 + $0x8] sm:$0xf]
      %v323 = vld [vmem:[%s304 + $0xc] sm:$0xf]
      %v324 = vld [vmem:[%s304 + $0x10] sm:$0xf]
      %v325 = vld [vmem:[%s304 + $0x14] sm:$0xf]
      %v326 = vld [vmem:[%s304 + $0x18] sm:$0xf]
      %v327 = vld [vmem:[%s304 + $0x1c] sm:$0xf]
      %v328 = vld [vmem:[%s1] sm:$0xff]
      %v329 = vld [vmem:[%s1 + $0x8] sm:$0xf]
      %v330 = vld [vmem:[%s1 + $0xc] sm:$0xff]
      %v331 = vld [vmem:[%s1 + $0x14] sm:$0xf]
      %v332 = vld [vmem:[%s2] sm:$0x7]
      %v334 = vlaneseq
      %v335 = vshrl.u32 %v334, 7
      %v336 = vsub.s32 0, %v335
      %v337 = vrot.slane %v332, %v336
      %v338 = vlaneseq
      %v339 = vshrl.u32 %v338, 7
      %v340 = vsub.s32 1, %v339
      %v341 = vrot.slane %v332, %v340
      %v342 = vlaneseq
      %v343 = vshrl.u32 %v342, 7
      %v344 = vsub.s32 2, %v343
      %v345 = vrot.slane %v332, %v344
      %v357 = vunpack.c.l.b16 %v320
      %v358 = vunpack.c.l.b16 %v321
      %v359 = vunpack.c.l.b16 %v322
      %v360 = vunpack.c.l.b16 %v323
      %v361 = vunpack.c.l.b16 %v324
      %v362 = vunpack.c.l.b16 %v325
      %v363 = vunpack.c.l.b16 %v326
      %v364 = vunpack.c.l.b16 %v327
      %v365 = vpack.c.b16 %v358, %v357
      %v366 = vpack.c.b16 %v360, %v359
      %v367 = vpack.c.b16 %v362, %v361
      %v368 = vpack.c.b16 %v364, %v363
      %v373 = vunpack.c.l.b16 %v328
      %v374 = vunpack.c.h.b16 %v328
      %v375 = vunpack.c.l.b16 %v329
      %v376 = vunpack.c.l.b16 %v330
      %v377 = vunpack.c.h.b16 %v330
      %v378 = vunpack.c.l.b16 %v331
      %v379 = vpack.c.b16 %v376, %v373
      %v380 = vpack.c.b16 %v377, %v374
      %v381 = vpack.c.b16 %v378, %v375
      %vm385 = vcmask 130048
      %v387 = vsel %vm385, %v365, 0
      %v390 = vsel %vm385, %v366, 0
      %v393 = vsel %vm385, %v367, 0
      %v396 = vsel %vm385, %v368, 0
      %398 = vmatprep.subr.bf16.mxu0 %v380
      %399 = vmatpush1.bf16.msra.mxu0 %v379
      %400 = vmatprep.subr.bf16.mxu0 0
      %401 = vmatpush1.bf16.msra.mxu0 0
      %402 = vmatprep.subr.bf16.mxu0 0
      %403 = vmatpush1.bf16.msra.mxu0 0
      %404 = vmatprep.subr.bf16.mxu0 0
      %405 = vmatpush1.bf16.msra.mxu0 0
      %406 = vmatprep.subr.bf16.mxu0 0
      %407 = vmatpush1.bf16.msra.mxu0 0
      %408 = vmatprep.subr.bf16.mxu0 0
      %409 = vmatpush1.bf16.msra.mxu0 0
      %410 = vmatprep.subr.bf16.mxu0 0
      %411 = vmatpush1.bf16.msra.mxu0 0
      %412 = vmatprep.subr.bf16.mxu0 0
      %413 = vmatpush1.bf16.msra.mxu0 0
      %414 = vmatprep.subr.bf16.mxu0 0
      %415 = vmatpush1.bf16.msra.mxu0 0
      %416 = vmatprep.subr.bf16.mxu0 0
      %417 = vmatpush1.bf16.msra.mxu0 0
      %418 = vmatprep.subr.bf16.mxu0 0
      %419 = vmatpush1.bf16.msra.mxu0 0
      %420 = vmatprep.subr.bf16.mxu0 0
      %421 = vmatpush1.bf16.msra.mxu0 0
      %422 = vmatprep.subr.bf16.mxu0 0
      %423 = vmatpush1.bf16.msra.mxu0 0
      %424 = vmatprep.subr.bf16.mxu0 0
      %425 = vmatpush1.bf16.msra.mxu0 0
      %426 = vmatprep.subr.bf16.mxu0 0
      %427 = vmatpush1.bf16.msra.mxu0 0
      %428 = vmatprep.subr.bf16.mxu0 0
      %429 = vmatpush1.bf16.msra.mxu0 0
      %430 = vmatprep.mubr.bf16.mxu0 0
      %431 = vmatmul.mubr.bf16.gmra.mrb[0].mxu0 %v387
      %v432 = vpop.f32.mrb[0].mxu0
      %v433 = vadd.f32 %v337, %v432
      %v434 = vpop.f32.mrb[0].mxu0
      %v435 = vadd.f32 %v341, %v434
      %v436 = vpop.f32.mrb[0].mxu0
      %v437 = vadd.f32 %v337, %v436
      %v438 = vpop.f32.mrb[0].mxu0
      %v439 = vadd.f32 %v341, %v438
      %440 = vmatprep.mubr.bf16.mxu0 0
      %441 = vmatmul.mubr.bf16.gmra.mrb[0].mxu0 %v390
      %v442 = vpop.f32.mrb[0].mxu0
      %v443 = vadd.f32 %v337, %v442
      %v444 = vpop.f32.mrb[0].mxu0
      %v445 = vadd.f32 %v341, %v444
      %v446 = vpop.f32.mrb[0].mxu0
      %v447 = vadd.f32 %v337, %v446
      %v448 = vpop.f32.mrb[0].mxu0
      %v449 = vadd.f32 %v341, %v448
      %450 = vmatprep.mubr.bf16.mxu0 0
      %451 = vmatmul.mubr.bf16.gmra.mrb[0].mxu0 %v393
      %v452 = vpop.f32.mrb[0].mxu0
      %v453 = vadd.f32 %v337, %v452
      %v454 = vpop.f32.mrb[0].mxu0
      %v455 = vadd.f32 %v341, %v454
      %v456 = vpop.f32.mrb[0].mxu0
      %v457 = vadd.f32 %v337, %v456
      %v458 = vpop.f32.mrb[0].mxu0
      %v459 = vadd.f32 %v341, %v458
      %460 = vmatprep.mubr.bf16.mxu0 0
      %461 = vmatmul.mubr.bf16.gmra.mrb[0].mxu0 %v396
      %v462 = vpop.f32.mrb[0].mxu0
      %v463 = vadd.f32 %v337, %v462
      %v464 = vpop.f32.mrb[0].mxu0
      %v465 = vadd.f32 %v341, %v464
      %v466 = vpop.f32.mrb[0].mxu0
      %v467 = vadd.f32 %v337, %v466
      %v468 = vpop.f32.mrb[0].mxu0
      %v469 = vadd.f32 %v341, %v468
      %470 = vdwg.mxu0
      %471 = vmatprep.subr.bf16.mxu0 0
      %472 = vmatpush1.bf16.msra.mxu0 %v381
      %473 = vmatprep.subr.bf16.mxu0 0
      %474 = vmatpush1.bf16.msra.mxu0 0
      %475 = vmatprep.subr.bf16.mxu0 0
      %476 = vmatpush1.bf16.msra.mxu0 0
      %477 = vmatprep.subr.bf16.mxu0 0
      %478 = vmatpush1.bf16.msra.mxu0 0
      %479 = vmatprep.subr.bf16.mxu0 0
      %480 = vmatpush1.bf16.msra.mxu0 0
      %481 = vmatprep.subr.bf16.mxu0 0
      %482 = vmatpush1.bf16.msra.mxu0 0
      %483 = vmatprep.subr.bf16.mxu0 0
      %484 = vmatpush1.bf16.msra.mxu0 0
      %485 = vmatprep.subr.bf16.mxu0 0
      %486 = vmatpush1.bf16.msra.mxu0 0
      %487 = vmatprep.subr.bf16.mxu0 0
      %488 = vmatpush1.bf16.msra.mxu0 0
      %489 = vmatprep.subr.bf16.mxu0 0
      %490 = vmatpush1.bf16.msra.mxu0 0
      %491 = vmatprep.subr.bf16.mxu0 0
      %492 = vmatpush1.bf16.msra.mxu0 0
      %493 = vmatprep.subr.bf16.mxu0 0
      %494 = vmatpush1.bf16.msra.mxu0 0
      %495 = vmatprep.subr.bf16.mxu0 0
      %496 = vmatpush1.bf16.msra.mxu0 0
      %497 = vmatprep.subr.bf16.mxu0 0
      %498 = vmatpush1.bf16.msra.mxu0 0
      %499 = vmatprep.subr.bf16.mxu0 0
      %500 = vmatpush1.bf16.msra.mxu0 0
      %501 = vmatprep.subr.bf16.mxu0 0
      %502 = vmatpush1.bf16.msra.mxu0 0
      %503 = vmatprep.mubr.bf16.mxu0 0
      %504 = vmatmul.mubr.bf16.gmra.mrb[0].mxu0 %v387
      %v505 = vpop.f32.mrb[0].mxu0
      %v506 = vadd.f32 %v345, %v505
      %v507 = vpop.f32.mrb[0].mxu0
      %v508 = vpop.f32.mrb[0].mxu0
      %v509 = vadd.f32 %v345, %v508
      %v510 = vpop.f32.mrb[0].mxu0
      %511 = vmatprep.mubr.bf16.mxu0 0
      %512 = vmatmul.mubr.bf16.gmra.mrb[0].mxu0 %v390
      %v513 = vpop.f32.mrb[0].mxu0
      %v514 = vadd.f32 %v345, %v513
      %v515 = vpop.f32.mrb[0].mxu0
      %v516 = vpop.f32.mrb[0].mxu0
      %v517 = vadd.f32 %v345, %v516
      %v518 = vpop.f32.mrb[0].mxu0
      %519 = vmatprep.mubr.bf16.mxu0 0
      %520 = vmatmul.mubr.bf16.gmra.mrb[0].mxu0 %v393
      %v521 = vpop.f32.mrb[0].mxu0
      %v522 = vadd.f32 %v345, %v521
      %v523 = vpop.f32.mrb[0].mxu0
      %v524 = vpop.f32.mrb[0].mxu0
      %v525 = vadd.f32 %v345, %v524
      %v526 = vpop.f32.mrb[0].mxu0
      %527 = vmatprep.mubr.bf16.mxu0 0
      %528 = vmatmul.mubr.bf16.gmra.mrb[0].mxu0 %v396
      %v529 = vpop.f32.mrb[0].mxu0
      %v530 = vadd.f32 %v345, %v529
      %v531 = vpop.f32.mrb[0].mxu0
      %v532 = vpop.f32.mrb[0].mxu0
      %v533 = vadd.f32 %v345, %v532
      %v534 = vpop.f32.mrb[0].mxu0
      %535 = vdwg.mxu0
      %v536 = vpack.c.bf16 %v437, %v433
      %v537 = vpack.c.bf16 %v439, %v435
      %v538 = vpack.c.bf16 %v509, %v506
      %v539 = vpack.c.bf16 %v447, %v443
      %v540 = vpack.c.bf16 %v449, %v445
      %v541 = vpack.c.bf16 %v517, %v514
      %v542 = vpack.c.bf16 %v457, %v453
      %v543 = vpack.c.bf16 %v459, %v455
      %v544 = vpack.c.bf16 %v525, %v522
      %v545 = vpack.c.bf16 %v467, %v463
      %v546 = vpack.c.bf16 %v469, %v465
      %v547 = vpack.c.bf16 %v533, %v530
      %548 = vst [vmem:[#allocation2] sm:$0xff] %v536
      %549 = vst [vmem:[#allocation2 + $0x8] sm:$0xff] %v537
      %550 = vst [vmem:[#allocation2 + $0x10] sm:$0xff] %v538
      %551 = vst [vmem:[#allocation2 + $0x18] sm:$0xff] %v539
      %552 = vst [vmem:[#allocation2 + $0x20] sm:$0xff] %v540
      %553 = vst [vmem:[#allocation2 + $0x28] sm:$0xff] %v541
      %554 = vst [vmem:[#allocation2 + $0x30] sm:$0xff] %v542
      %555 = vst [vmem:[#allocation2 + $0x38] sm:$0xff] %v543
      %556 = vst [vmem:[#allocation2 + $0x40] sm:$0xff] %v544
      %557 = vst [vmem:[#allocation2 + $0x48] sm:$0xff] %v545
      %558 = vst [vmem:[#allocation2 + $0x50] sm:$0xff] %v546
      %559 = vst [vmem:[#allocation2 + $0x58] sm:$0xff] %v547
      %v560 = vld [vmem:[%s3] sm:$0xff]
      %v561 = vld [vmem:[%s3 + $0x8] sm:$0xf]
      %v562 = vld [vmem:[%s3 + $0xc] sm:$0xff]
      %v563 = vld [vmem:[%s3 + $0x14] sm:$0xf]
      %v564 = vld [vmem:[%s3 + $0x18] sm:$0xff]
      %v565 = vld [vmem:[%s3 + $0x20] sm:$0xf]
      %v566 = vld [vmem:[%s3 + $0x24] sm:$0xff]
      %v567 = vld [vmem:[%s3 + $0x2c] sm:$0xf]
      %v568 = vld [vmem:[%s3 + $0x30] sm:$0xff]
      %v569 = vld [vmem:[%s3 + $0x38] sm:$0xf]
      %v570 = vld [vmem:[%s3 + $0x3c] sm:$0xff]
      %v571 = vld [vmem:[%s3 + $0x44] sm:$0xf]
      %v572 = vld [vmem:[%s3 + $0x48] sm:$0xff]
      %v573 = vld [vmem:[%s3 + $0x50] sm:$0xf]
      %v574 = vld [vmem:[%s3 + $0x54] sm:$0xff]
      %v575 = vld [vmem:[%s3 + $0x5c] sm:$0xf]
      %v576 = vld [vmem:[%s3 + $0x60] sm:$0xff]
      %v577 = vld [vmem:[%s3 + $0x68] sm:$0xf]
      %v578 = vld [vmem:[%s3 + $0x6c] sm:$0xff]
      %v579 = vld [vmem:[%s3 + $0x74] sm:$0xf]
      %v580 = vld [vmem:[%s3 + $0x78] sm:$0xff]
      %v581 = vld [vmem:[%s3 + $0x80] sm:$0xf]
      %v582 = vld [vmem:[%s3 + $0x84] sm:$0xff]
      %v583 = vld [vmem:[%s3 + $0x8c] sm:$0xf]
      %v584 = vld [vmem:[%s3 + $0x90] sm:$0xff]
      %v585 = vld [vmem:[%s3 + $0x98] sm:$0xf]
      %v586 = vld [vmem:[%s3 + $0x9c] sm:$0xff]
      %v587 = vld [vmem:[%s3 + $0xa4] sm:$0xf]
      %v588 = vld [vmem:[%s3 + $0xa8] sm:$0xff]
      %v589 = vld [vmem:[%s3 + $0xb0] sm:$0xf]
      %v590 = vld [vmem:[%s3 + $0xb4] sm:$0xff]
      %v591 = vld [vmem:[%s3 + $0xbc] sm:$0xf]
      %v592 = vld [vmem:[%s4] sm:$0x1]
      %v594 = vlaneseq
      %v595 = vshrl.u32 %v594, 7
      %v596 = vsub.s32 0, %v595
      %v597 = vrot.slane %v592, %v596
      %v599 = vld [vmem:[#allocation3] sm:$0xff]
      %v600 = vld [vmem:[#allocation3 + $0x8] sm:$0xff]
      %v601 = vpack.c.bf16 %v600, %v599
      %s602 = smul.u32 0, 3
      %s603 = smul.addr %s602, 8
      %s604 = scalar_lea.vmem [#allocation2], %s603
      %v605 = vld [vmem:[%s604] sm:$0xff]
      %v606 = vld [vmem:[%s604 + $0x8] sm:$0xff]
      %v607 = vld [vmem:[%s604 + $0x10] sm:$0xff]
      %v608 = vunpack.c.l.bf16 %v605
      %v609 = vunpack.c.l.bf16 %v606
      %v610 = vunpack.c.l.bf16 %v607
      %v611 = vunpack.c.h.bf16 %v605
      %v612 = vunpack.c.h.bf16 %v606
      %v613 = vunpack.c.h.bf16 %v607
      %v646 = vunpack.c.l.b16 %v560
      %v647 = vunpack.c.h.b16 %v560
      %v648 = vunpack.c.l.b16 %v561
      %v649 = vunpack.c.l.b16 %v562
      %v650 = vunpack.c.h.b16 %v562
      %v651 = vunpack.c.l.b16 %v563
      %v652 = vunpack.c.l.b16 %v564
      %v653 = vunpack.c.h.b16 %v564
      %v654 = vunpack.c.l.b16 %v565
      %v655 = vunpack.c.l.b16 %v566
      %v656 = vunpack.c.h.b16 %v566
      %v657 = vunpack.c.l.b16 %v567
      %v658 = vunpack.c.l.b16 %v568
      %v659 = vunpack.c.h.b16 %v568
      %v660 = vunpack.c.l.b16 %v569
      %v661 = vunpack.c.l.b16 %v570
      %v662 = vunpack.c.h.b16 %v570
      %v663 = vunpack.c.l.b16 %v571
      %v664 = vunpack.c.l.b16 %v572
      %v665 = vunpack.c.h.b16 %v572
      %v666 = vunpack.c.l.b16 %v573
      %v667 = vunpack.c.l.b16 %v574
      %v668 = vunpack.c.h.b16 %v574
      %v669 = vunpack.c.l.b16 %v575
      %v670 = vunpack.c.l.b16 %v576
      %v671 = vunpack.c.h.b16 %v576
      %v672 = vunpack.c.l.b16 %v577
      %v673 = vunpack.c.l.b16 %v578
      %v674 = vunpack.c.h.b16 %v578
      %v675 = vunpack.c.l.b16 %v579
      %v676 = vunpack.c.l.b16 %v580
      %v677 = vunpack.c.h.b16 %v580
      %v678 = vunpack.c.l.b16 %v581
      %v679 = vunpack.c.l.b16 %v582
      %v680 = vunpack.c.h.b16 %v582
      %v681 = vunpack.c.l.b16 %v583
      %v682 = vunpack.c.l.b16 %v584
      %v683 = vunpack.c.h.b16 %v584
      %v684 = vunpack.c.l.b16 %v585
      %v685 = vunpack.c.l.b16 %v586
      %v686 = vunpack.c.h.b16 %v586
      %v687 = vunpack.c.l.b16 %v587
      %v688 = vunpack.c.l.b16 %v588
      %v689 = vunpack.c.h.b16 %v588
      %v690 = vunpack.c.l.b16 %v589
      %v691 = vunpack.c.l.b16 %v590
      %v692 = vunpack.c.h.b16 %v590
      %v693 = vunpack.c.l.b16 %v591
      %v694 = vpack.c.b16 %v649, %v646
      %v695 = vpack.c.b16 %v650, %v647
      %v696 = vpack.c.b16 %v651, %v648
      %v697 = vpack.c.b16 %v655, %v652
      %v698 = vpack.c.b16 %v656, %v653
      %v699 = vpack.c.b16 %v657, %v654
      %v700 = vpack.c.b16 %v661, %v658
      %v701 = vpack.c.b16 %v662, %v659
      %v702 = vpack.c.b16 %v663, %v660
      %v703 = vpack.c.b16 %v667, %v664
      %v704 = vpack.c.b16 %v668, %v665
      %v705 = vpack.c.b16 %v669, %v666
      %v706 = vpack.c.b16 %v673, %v670
      %v707 = vpack.c.b16 %v674, %v671
      %v708 = vpack.c.b16 %v675, %v672
      %v709 = vpack.c.b16 %v679, %v676
      %v710 = vpack.c.b16 %v680, %v677
      %v711 = vpack.c.b16 %v681, %v678
      %v712 = vpack.c.b16 %v685, %v682
      %v713 = vpack.c.b16 %v686, %v683
      %v714 = vpack.c.b16 %v687, %v684
      %v715 = vpack.c.b16 %v691, %v688
      %v716 = vpack.c.b16 %v692, %v689
      %v717 = vpack.c.b16 %v693, %v690
      %742 = vmatprep.subr.bf16.mxu0 %v695
      %743 = vmatpush1.bf16.msra.mxu0 %v694
      %744 = vmatprep.subr.bf16.mxu0 %v698
      %745 = vmatpush1.bf16.msra.mxu0 %v697
      %746 = vmatprep.subr.bf16.mxu0 %v701
      %747 = vmatpush1.bf16.msra.mxu0 %v700
      %748 = vmatprep.subr.bf16.mxu0 %v704
      %749 = vmatpush1.bf16.msra.mxu0 %v703
      %750 = vmatprep.subr.bf16.mxu0 %v707
      %751 = vmatpush1.bf16.msra.mxu0 %v706
      %752 = vmatprep.subr.bf16.mxu0 %v710
      %753 = vmatpush1.bf16.msra.mxu0 %v709
      %754 = vmatprep.subr.bf16.mxu0 %v713
      %755 = vmatpush1.bf16.msra.mxu0 %v712
      %756 = vmatprep.subr.bf16.mxu0 %v716
      %757 = vmatpush1.bf16.msra.mxu0 %v715
      %758 = vmatprep.subr.bf16.mxu0 0
      %759 = vmatpush1.bf16.msra.mxu0 0
      %760 = vmatprep.subr.bf16.mxu0 0
      %761 = vmatpush1.bf16.msra.mxu0 0
      %762 = vmatprep.subr.bf16.mxu0 0
      %763 = vmatpush1.bf16.msra.mxu0 0
      %764 = vmatprep.subr.bf16.mxu0 0
      %765 = vmatpush1.bf16.msra.mxu0 0
      %766 = vmatprep.subr.bf16.mxu0 0
      %767 = vmatpush1.bf16.msra.mxu0 0
      %768 = vmatprep.subr.bf16.mxu0 0
      %769 = vmatpush1.bf16.msra.mxu0 0
      %770 = vmatprep.subr.bf16.mxu0 0
      %771 = vmatpush1.bf16.msra.mxu0 0
      %772 = vmatprep.subr.bf16.mxu0 0
      %773 = vmatpush1.bf16.msra.mxu0 0
      %774 = vmatprep.mubr.bf16.mxu0 0
      %775 = vmatmul.mubr.bf16.gmra.mrb[0].mxu0 %v601
      %v776 = vpop.f32.mrb[0].mxu0
      %v777 = vadd.f32 0.0, %v776
      %v778 = vpop.f32.mrb[0].mxu0
      %v779 = vadd.f32 0.0, %v778
      %v780 = vpop.f32.mrb[0].mxu0
      %v781 = vadd.f32 0.0, %v780
      %v782 = vpop.f32.mrb[0].mxu0
      %v783 = vadd.f32 0.0, %v782
      %784 = vdwg.mxu0
      %785 = vmatprep.subr.bf16.mxu0 0
      %786 = vmatpush1.bf16.msra.mxu0 %v696
      %787 = vmatprep.subr.bf16.mxu0 0
      %788 = vmatpush1.bf16.msra.mxu0 %v699
      %789 = vmatprep.subr.bf16.mxu0 0
      %790 = vmatpush1.bf16.msra.mxu0 %v702
      %791 = vmatprep.subr.bf16.mxu0 0
      %792 = vmatpush1.bf16.msra.mxu0 %v705
      %793 = vmatprep.subr.bf16.mxu0 0
      %794 = vmatpush1.bf16.msra.mxu0 %v708
      %795 = vmatprep.subr.bf16.mxu0 0
      %796 = vmatpush1.bf16.msra.mxu0 %v711
      %797 = vmatprep.subr.bf16.mxu0 0
      %798 = vmatpush1.bf16.msra.mxu0 %v714
      %799 = vmatprep.subr.bf16.mxu0 0
      %800 = vmatpush1.bf16.msra.mxu0 %v717
      %801 = vmatprep.subr.bf16.mxu0 0
      %802 = vmatpush1.bf16.msra.mxu0 0
      %803 = vmatprep.subr.bf16.mxu0 0
      %804 = vmatpush1.bf16.msra.mxu0 0
      %805 = vmatprep.subr.bf16.mxu0 0
      %806 = vmatpush1.bf16.msra.mxu0 0
      %807 = vmatprep.subr.bf16.mxu0 0
      %808 = vmatpush1.bf16.msra.mxu0 0
      %809 = vmatprep.subr.bf16.mxu0 0
      %810 = vmatpush1.bf16.msra.mxu0 0
      %811 = vmatprep.subr.bf16.mxu0 0
      %812 = vmatpush1.bf16.msra.mxu0 0
      %813 = vmatprep.subr.bf16.mxu0 0
      %814 = vmatpush1.bf16.msra.mxu0 0
      %815 = vmatprep.subr.bf16.mxu0 0
      %816 = vmatpush1.bf16.msra.mxu0 0
      %817 = vmatprep.mubr.bf16.mxu0 0
      %818 = vmatmul.mubr.bf16.gmra.mrb[0].mxu0 %v601
      %v819 = vpop.f32.mrb[0].mxu0
      %v820 = vadd.f32 0.0, %v819
      %v821 = vpop.f32.mrb[0].mxu0
      %v822 = vpop.f32.mrb[0].mxu0
      %v823 = vadd.f32 0.0, %v822
      %v824 = vpop.f32.mrb[0].mxu0
      %825 = vdwg.mxu0
      %v826 = vadd.f32 %v608, %v777
      %v827 = vadd.f32 %v611, %v781
      %v828 = vxor.u32 %v826, 2147483648
      %v829 = vxor.u32 %v827, 2147483648
      %v830 = vmul.f32 %v828, 1.442695
      %v831 = vpow.pop %v830
      %v832 = vmul.f32 %v829, 1.442695
      %v833 = vpow.pop %v832
      %v834 = vadd.f32 %v831, 1.0
      %v835 = vadd.f32 %v833, 1.0
      %v836 = vrcp.pop %v834
      %v837 = vmul.f32 1.0, %v836
      %v838 = vrcp.pop %v835
      %v839 = vmul.f32 1.0, %v838
      %v840 = vadd.f32 %v609, %v779
      %v841 = vadd.f32 %v612, %v783
      %v842 = vxor.u32 %v840, 2147483648
      %v843 = vxor.u32 %v841, 2147483648
      %v844 = vmul.f32 %v842, 1.442695
      %v845 = vpow.pop %v844
      %v846 = vmul.f32 %v843, 1.442695
      %v847 = vpow.pop %v846
      %v848 = vadd.f32 %v845, 1.0
      %v849 = vadd.f32 %v847, 1.0
      %v850 = vrcp.pop %v848
      %v851 = vmul.f32 1.0, %v850
      %v852 = vrcp.pop %v849
      %v853 = vmul.f32 1.0, %v852
      %v854 = vadd.f32 %v820, %v597
      %v855 = vadd.f32 %v823, %v597
      %v856 = vmul.f32 %v837, %v854
      %v857 = vmul.f32 %v839, %v855
      %v858 = vadd.f32 %v610, %v856
      %v859 = vadd.f32 %v613, %v857
      %v860 = vtanh.pop %v858
      %v861 = vtanh.pop %v859
      %v862 = vsub.f32 1.0, %v851
      %v863 = vsub.f32 1.0, %v853
      %v864 = vmul.f32 %v862, %v860
      %v865 = vmul.f32 %v863, %v861
      %v866 = vmul.f32 %v851, %v599
      %v867 = vmul.f32 %v853, %v600
      %v868 = vadd.f32 %v864, %v866
      %v869 = vadd.f32 %v865, %v867
      %v870 = vpack.c.bf16 %v869, %v868
      %s871 = smul.u32 1, 3
      %s872 = smul.addr %s871, 8
      %s873 = scalar_lea.vmem [#allocation2], %s872
      %v874 = vld [vmem:[%s873] sm:$0xff]
      %v875 = vld [vmem:[%s873 + $0x8] sm:$0xff]
      %v876 = vld [vmem:[%s873 + $0x10] sm:$0xff]
      %v877 = vunpack.c.l.bf16 %v874
      %v878 = vunpack.c.l.bf16 %v875
      %v879 = vunpack.c.l.bf16 %v876
      %v880 = vunpack.c.h.bf16 %v874
      %v881 = vunpack.c.h.bf16 %v875
      %v882 = vunpack.c.h.bf16 %v876
      %883 = vmatprep.subr.bf16.mxu0 %v695
      %884 = vmatpush1.bf16.msra.mxu0 %v694
      %885 = vmatprep.subr.bf16.mxu0 %v698
      %886 = vmatpush1.bf16.msra.mxu0 %v697
      %887 = vmatprep.subr.bf16.mxu0 %v701
      %888 = vmatpush1.bf16.msra.mxu0 %v700
      %889 = vmatprep.subr.bf16.mxu0 %v704
      %890 = vmatpush1.bf16.msra.mxu0 %v703
      %891 = vmatprep.subr.bf16.mxu0 %v707
      %892 = vmatpush1.bf16.msra.mxu0 %v706
      %893 = vmatprep.subr.bf16.mxu0 %v710
      %894 = vmatpush1.bf16.msra.mxu0 %v709
      %895 = vmatprep.subr.bf16.mxu0 %v713
      %896 = vmatpush1.bf16.msra.mxu0 %v712
      %897 = vmatprep.subr.bf16.mxu0 %v716
      %898 = vmatpush1.bf16.msra.mxu0 %v715
      %899 = vmatprep.subr.bf16.mxu0 0
      %900 = vmatpush1.bf16.msra.mxu0 0
      %901 = vmatprep.subr.bf16.mxu0 0
      %902 = vmatpush1.bf16.msra.mxu0 0
      %903 = vmatprep.subr.bf16.mxu0 0
      %904 = vmatpush1.bf16.msra.mxu0 0
      %905 = vmatprep.subr.bf16.mxu0 0
      %906 = vmatpush1.bf16.msra.mxu0 0
      %907 = vmatprep.subr.bf16.mxu0 0
      %908 = vmatpush1.bf16.msra.mxu0 0
      %909 = vmatprep.subr.bf16.mxu0 0
      %910 = vmatpush1.bf16.msra.mxu0 0
      %911 = vmatprep.subr.bf16.mxu0 0
      %912 = vmatpush1.bf16.msra.mxu0 0
      %913 = vmatprep.subr.bf16.mxu0 0
      %914 = vmatpush1.bf16.msra.mxu0 0
      %915 = vmatprep.mubr.bf16.mxu0 0
      %916 = vmatmul.mubr.bf16.gmra.mrb[0].mxu0 %v870
      %v917 = vpop.f32.mrb[0].mxu0
      %v918 = vadd.f32 0.0, %v917
      %v919 = vpop.f32.mrb[0].mxu0
      %v920 = vadd.f32 0.0, %v919
      %v921 = vpop.f32.mrb[0].mxu0
      %v922 = vadd.f32 0.0, %v921
      %v923 = vpop.f32.mrb[0].mxu0
      %v924 = vadd.f32 0.0, %v923
      %925 = vdwg.mxu0
      %926 = vmatprep.subr.bf16.mxu0 0
      %927 = vmatpush1.bf16.msra.mxu0 %v696
      %928 = vmatprep.subr.bf16.mxu0 0
      %929 = vmatpush1.bf16.msra.mxu0 %v699
      %930 = vmatprep.subr.bf16.mxu0 0
      %931 = vmatpush1.bf16.msra.mxu0 %v702
      %932 = vmatprep.subr.bf16.mxu0 0
      %933 = vmatpush1.bf16.msra.mxu0 %v705
      %934 = vmatprep.subr.bf16.mxu0 0
      %935 = vmatpush1.bf16.msra.mxu0 %v708
      %936 = vmatprep.subr.bf16.mxu0 0
      %937 = vmatpush1.bf16.msra.mxu0 %v711
      %938 = vmatprep.subr.bf16.mxu0 0
      %939 = vmatpush1.bf16.msra.mxu0 %v714
      %940 = vmatprep.subr.bf16.mxu0 0
      %941 = vmatpush1.bf16.msra.mxu0 %v717
      %942 = vmatprep.subr.bf16.mxu0 0
      %943 = vmatpush1.bf16.msra.mxu0 0
      %944 = vmatprep.subr.bf16.mxu0 0
      %945 = vmatpush1.bf16.msra.mxu0 0
      %946 = vmatprep.subr.bf16.mxu0 0
      %947 = vmatpush1.bf16.msra.mxu0 0
      %948 = vmatprep.subr.bf16.mxu0 0
      %949 = vmatpush1.bf16.msra.mxu0 0
      %950 = vmatprep.subr.bf16.mxu0 0
      %951 = vmatpush1.bf16.msra.mxu0 0
      %952 = vmatprep.subr.bf16.mxu0 0
      %953 = vmatpush1.bf16.msra.mxu0 0
      %954 = vmatprep.subr.bf16.mxu0 0
      %955 = vmatpush1.bf16.msra.mxu0 0
      %956 = vmatprep.subr.bf16.mxu0 0
      %957 = vmatpush1.bf16.msra.mxu0 0
      %958 = vmatprep.mubr.bf16.mxu0 0
      %959 = vmatmul.mubr.bf16.gmra.mrb[0].mxu0 %v870
      %v960 = vpop.f32.mrb[0].mxu0
      %v961 = vadd.f32 0.0, %v960
      %v962 = vpop.f32.mrb[0].mxu0
      %v963 = vpop.f32.mrb[0].mxu0
      %v964 = vadd.f32 0.0, %v963
      %v965 = vpop.f32.mrb[0].mxu0
      %966 = vdwg.mxu0
      %v967 = vadd.f32 %v877, %v918
      %v968 = vadd.f32 %v880, %v922
      %v969 = vxor.u32 %v967, 2147483648
      %v970 = vxor.u32 %v968, 2147483648
      %v971 = vmul.f32 %v969, 1.442695
      %v972 = vpow.pop %v971
      %v973 = vmul.f32 %v970, 1.442695
      %v974 = vpow.pop %v973
      %v975 = vadd.f32 %v972, 1.0
      %v976 = vadd.f32 %v974, 1.0
      %v977 = vrcp.pop %v975
      %v978 = vmul.f32 1.0, %v977
      %v979 = vrcp.pop %v976
      %v980 = vmul.f32 1.0, %v979
      %v981 = vadd.f32 %v878, %v920
      %v982 = vadd.f32 %v881, %v924
      %v983 = vxor.u32 %v981, 2147483648
      %v984 = vxor.u32 %v982, 2147483648
      %v985 = vmul.f32 %v983, 1.442695
      %v986 = vpow.pop %v985
      %v987 = vmul.f32 %v984, 1.442695
      %v988 = vpow.pop %v987
      %v989 = vadd.f32 %v986, 1.0
      %v990 = vadd.f32 %v988, 1.0
      %v991 = vrcp.pop %v989
      %v992 = vmul.f32 1.0, %v991
      %v993 = vrcp.pop %v990
      %v994 = vmul.f32 1.0, %v993
      %v995 = vadd.f32 %v961, %v597
      %v996 = vadd.f32 %v964, %v597
      %v997 = vmul.f32 %v978, %v995
      %v998 = vmul.f32 %v980, %v996
      %v999 = vadd.f32 %v879, %v997
      %v1000 = vadd.f32 %v882, %v998
      %v1001 = vtanh.pop %v999
      %v1002 = vtanh.pop %v1000
      %v1003 = vsub.f32 1.0, %v992
      %v1004 = vsub.f32 1.0, %v994
      %v1005 = vmul.f32 %v1003, %v1001
      %v1006 = vmul.f32 %v1004, %v1002
      %v1007 = vmul.f32 %v992, %v868
      %v1008 = vmul.f32 %v994, %v869
      %v1009 = vadd.f32 %v1005, %v1007
      %v1010 = vadd.f32 %v1006, %v1008
      %v1011 = vpack.c.bf16 %v1010, %v1009
      %s1012 = smul.u32 2, 3
      %s1013 = smul.addr %s1012, 8
      %s1014 = scalar_lea.vmem [#allocation2], %s1013
      %v1015 = vld [vmem:[%s1014] sm:$0xff]
      %v1016 = vld [vmem:[%s1014 + $0x8] sm:$0xff]
      %v1017 = vld [vmem:[%s1014 + $0x10] sm:$0xff]
      %v1018 = vunpack.c.l.bf16 %v1015
      %v1019 = vunpack.c.l.bf16 %v1016
      %v1020 = vunpack.c.l.bf16 %v1017
      %v1021 = vunpack.c.h.bf16 %v1015
      %v1022 = vunpack.c.h.bf16 %v1016
      %v1023 = vunpack.c.h.bf16 %v1017
      %1024 = vmatprep.subr.bf16.mxu0 %v695
      %1025 = vmatpush1.bf16.msra.mxu0 %v694
      %1026 = vmatprep.subr.bf16.mxu0 %v698
      %1027 = vmatpush1.bf16.msra.mxu0 %v697
      %1028 = vmatprep.subr.bf16.mxu0 %v701
      %1029 = vmatpush1.bf16.msra.mxu0 %v700
      %1030 = vmatprep.subr.bf16.mxu0 %v704
      %1031 = vmatpush1.bf16.msra.mxu0 %v703
      %1032 = vmatprep.subr.bf16.mxu0 %v707
      %1033 = vmatpush1.bf16.msra.mxu0 %v706
      %1034 = vmatprep.subr.bf16.mxu0 %v710
      %1035 = vmatpush1.bf16.msra.mxu0 %v709
      %1036 = vmatprep.subr.bf16.mxu0 %v713
      %1037 = vmatpush1.bf16.msra.mxu0 %v712
      %1038 = vmatprep.subr.bf16.mxu0 %v716
      %1039 = vmatpush1.bf16.msra.mxu0 %v715
      %1040 = vmatprep.subr.bf16.mxu0 0
      %1041 = vmatpush1.bf16.msra.mxu0 0
      %1042 = vmatprep.subr.bf16.mxu0 0
      %1043 = vmatpush1.bf16.msra.mxu0 0
      %1044 = vmatprep.subr.bf16.mxu0 0
      %1045 = vmatpush1.bf16.msra.mxu0 0
      %1046 = vmatprep.subr.bf16.mxu0 0
      %1047 = vmatpush1.bf16.msra.mxu0 0
      %1048 = vmatprep.subr.bf16.mxu0 0
      %1049 = vmatpush1.bf16.msra.mxu0 0
      %1050 = vmatprep.subr.bf16.mxu0 0
      %1051 = vmatpush1.bf16.msra.mxu0 0
      %1052 = vmatprep.subr.bf16.mxu0 0
      %1053 = vmatpush1.bf16.msra.mxu0 0
      %1054 = vmatprep.subr.bf16.mxu0 0
      %1055 = vmatpush1.bf16.msra.mxu0 0
      %1056 = vmatprep.mubr.bf16.mxu0 0
      %1057 = vmatmul.mubr.bf16.gmra.mrb[0].mxu0 %v1011
      %v1058 = vpop.f32.mrb[0].mxu0
      %v1059 = vadd.f32 0.0, %v1058
      %v1060 = vpop.f32.mrb[0].mxu0
      %v1061 = vadd.f32 0.0, %v1060
      %v1062 = vpop.f32.mrb[0].mxu0
      %v1063 = vadd.f32 0.0, %v1062
      %v1064 = vpop.f32.mrb[0].mxu0
      %v1065 = vadd.f32 0.0, %v1064
      %1066 = vdwg.mxu0
      %1067 = vmatprep.subr.bf16.mxu0 0
      %1068 = vmatpush1.bf16.msra.mxu0 %v696
      %1069 = vmatprep.subr.bf16.mxu0 0
      %1070 = vmatpush1.bf16.msra.mxu0 %v699
      %1071 = vmatprep.subr.bf16.mxu0 0
      %1072 = vmatpush1.bf16.msra.mxu0 %v702
      %1073 = vmatprep.subr.bf16.mxu0 0
      %1074 = vmatpush1.bf16.msra.mxu0 %v705
      %1075 = vmatprep.subr.bf16.mxu0 0
      %1076 = vmatpush1.bf16.msra.mxu0 %v708
      %1077 = vmatprep.subr.bf16.mxu0 0
      %1078 = vmatpush1.bf16.msra.mxu0 %v711
      %1079 = vmatprep.subr.bf16.mxu0 0
      %1080 = vmatpush1.bf16.msra.mxu0 %v714
      %1081 = vmatprep.subr.bf16.mxu0 0
      %1082 = vmatpush1.bf16.msra.mxu0 %v717
      %1083 = vmatprep.subr.bf16.mxu0 0
      %1084 = vmatpush1.bf16.msra.mxu0 0
      %1085 = vmatprep.subr.bf16.mxu0 0
      %1086 = vmatpush1.bf16.msra.mxu0 0
      %1087 = vmatprep.subr.bf16.mxu0 0
      %1088 = vmatpush1.bf16.msra.mxu0 0
      %1089 = vmatprep.subr.bf16.mxu0 0
      %1090 = vmatpush1.bf16.msra.mxu0 0
      %1091 = vmatprep.subr.bf16.mxu0 0
      %1092 = vmatpush1.bf16.msra.mxu0 0
      %1093 = vmatprep.subr.bf16.mxu0 0
      %1094 = vmatpush1.bf16.msra.mxu0 0
      %1095 = vmatprep.subr.bf16.mxu0 0
      %1096 = vmatpush1.bf16.msra.mxu0 0
      %1097 = vmatprep.subr.bf16.mxu0 0
      %1098 = vmatpush1.bf16.msra.mxu0 0
      %1099 = vmatprep.mubr.bf16.mxu0 0
      %1100 = vmatmul.mubr.bf16.gmra.mrb[0].mxu0 %v1011
      %v1101 = vpop.f32.mrb[0].mxu0
      %v1102 = vadd.f32 0.0, %v1101
      %v1103 = vpop.f32.mrb[0].mxu0
      %v1104 = vpop.f32.mrb[0].mxu0
      %v1105 = vadd.f32 0.0, %v1104
      %v1106 = vpop.f32.mrb[0].mxu0
      %1107 = vdwg.mxu0
      %v1108 = vadd.f32 %v1018, %v1059
      %v1109 = vadd.f32 %v1021, %v1063
      %v1110 = vxor.u32 %v1108, 2147483648
      %v1111 = vxor.u32 %v1109, 2147483648
      %v1112 = vmul.f32 %v1110, 1.442695
      %v1113 = vpow.pop %v1112
      %v1114 = vmul.f32 %v1111, 1.442695
      %v1115 = vpow.pop %v1114
      %v1116 = vadd.f32 %v1113, 1.0
      %v1117 = vadd.f32 %v1115, 1.0
      %v1118 = vrcp.pop %v1116
      %v1119 = vmul.f32 1.0, %v1118
      %v1120 = vrcp.pop %v1117
      %v1121 = vmul.f32 1.0, %v1120
      %v1122 = vadd.f32 %v1019, %v1061
      %v1123 = vadd.f32 %v1022, %v1065
      %v1124 = vxor.u32 %v1122, 2147483648
      %v1125 = vxor.u32 %v1123, 2147483648
      %v1126 = vmul.f32 %v1124, 1.442695
      %v1127 = vpow.pop %v1126
      %v1128 = vmul.f32 %v1125, 1.442695
      %v1129 = vpow.pop %v1128
      %v1130 = vadd.f32 %v1127, 1.0
      %v1131 = vadd.f32 %v1129, 1.0
      %v1132 = vrcp.pop %v1130
      %v1133 = vmul.f32 1.0, %v1132
      %v1134 = vrcp.pop %v1131
      %v1135 = vmul.f32 1.0, %v1134
      %v1136 = vadd.f32 %v1102, %v597
      %v1137 = vadd.f32 %v1105, %v597
      %v1138 = vmul.f32 %v1119, %v1136
      %v1139 = vmul.f32 %v1121, %v1137
      %v1140 = vadd.f32 %v1020, %v1138
      %v1141 = vadd.f32 %v1023, %v1139
      %v1142 = vtanh.pop %v1140
      %v1143 = vtanh.pop %v1141
      %v1144 = vsub.f32 1.0, %v1133
      %v1145 = vsub.f32 1.0, %v1135
      %v1146 = vmul.f32 %v1144, %v1142
      %v1147 = vmul.f32 %v1145, %v1143
      %v1148 = vmul.f32 %v1133, %v1009
      %v1149 = vmul.f32 %v1135, %v1010
      %v1150 = vadd.f32 %v1146, %v1148
      %v1151 = vadd.f32 %v1147, %v1149
      %v1152 = vpack.c.bf16 %v1151, %v1150
      %s1153 = smul.u32 3, 3
      %s1154 = smul.addr %s1153, 8
      %s1155 = scalar_lea.vmem [#allocation2], %s1154
      %v1156 = vld [vmem:[%s1155] sm:$0xff]
      %v1157 = vld [vmem:[%s1155 + $0x8] sm:$0xff]
      %v1158 = vld [vmem:[%s1155 + $0x10] sm:$0xff]
      %v1159 = vunpack.c.l.bf16 %v1156
      %v1160 = vunpack.c.l.bf16 %v1157
      %v1161 = vunpack.c.l.bf16 %v1158
      %v1162 = vunpack.c.h.bf16 %v1156
      %v1163 = vunpack.c.h.bf16 %v1157
      %v1164 = vunpack.c.h.bf16 %v1158
      %1165 = vmatprep.subr.bf16.mxu0 %v695
      %1166 = vmatpush1.bf16.msra.mxu0 %v694
      %1167 = vmatprep.subr.bf16.mxu0 %v698
      %1168 = vmatpush1.bf16.msra.mxu0 %v697
      %1169 = vmatprep.subr.bf16.mxu0 %v701
      %1170 = vmatpush1.bf16.msra.mxu0 %v700
      %1171 = vmatprep.subr.bf16.mxu0 %v704
      %1172 = vmatpush1.bf16.msra.mxu0 %v703
      %1173 = vmatprep.subr.bf16.mxu0 %v707
      %1174 = vmatpush1.bf16.msra.mxu0 %v706
      %1175 = vmatprep.subr.bf16.mxu0 %v710
      %1176 = vmatpush1.bf16.msra.mxu0 %v709
      %1177 = vmatprep.subr.bf16.mxu0 %v713
      %1178 = vmatpush1.bf16.msra.mxu0 %v712
      %1179 = vmatprep.subr.bf16.mxu0 %v716
      %1180 = vmatpush1.bf16.msra.mxu0 %v715
      %1181 = vmatprep.subr.bf16.mxu0 0
      %1182 = vmatpush1.bf16.msra.mxu0 0
      %1183 = vmatprep.subr.bf16.mxu0 0
      %1184 = vmatpush1.bf16.msra.mxu0 0
      %1185 = vmatprep.subr.bf16.mxu0 0
      %1186 = vmatpush1.bf16.msra.mxu0 0
      %1187 = vmatprep.subr.bf16.mxu0 0
      %1188 = vmatpush1.bf16.msra.mxu0 0
      %1189 = vmatprep.subr.bf16.mxu0 0
      %1190 = vmatpush1.bf16.msra.mxu0 0
      %1191 = vmatprep.subr.bf16.mxu0 0
      %1192 = vmatpush1.bf16.msra.mxu0 0
      %1193 = vmatprep.subr.bf16.mxu0 0
      %1194 = vmatpush1.bf16.msra.mxu0 0
      %1195 = vmatprep.subr.bf16.mxu0 0
      %1196 = vmatpush1.bf16.msra.mxu0 0
      %1197 = vmatprep.mubr.bf16.mxu0 0
      %1198 = vmatmul.mubr.bf16.gmra.mrb[0].mxu0 %v1152
      %v1199 = vpop.f32.mrb[0].mxu0
      %v1200 = vadd.f32 0.0, %v1199
      %v1201 = vpop.f32.mrb[0].mxu0
      %v1202 = vadd.f32 0.0, %v1201
      %v1203 = vpop.f32.mrb[0].mxu0
      %v1204 = vadd.f32 0.0, %v1203
      %v1205 = vpop.f32.mrb[0].mxu0
      %v1206 = vadd.f32 0.0, %v1205
      %1207 = vdwg.mxu0
      %1208 = vmatprep.subr.bf16.mxu0 0
      %1209 = vmatpush1.bf16.msra.mxu0 %v696
      %1210 = vmatprep.subr.bf16.mxu0 0
      %1211 = vmatpush1.bf16.msra.mxu0 %v699
      %1212 = vmatprep.subr.bf16.mxu0 0
      %1213 = vmatpush1.bf16.msra.mxu0 %v702
      %1214 = vmatprep.subr.bf16.mxu0 0
      %1215 = vmatpush1.bf16.msra.mxu0 %v705
      %1216 = vmatprep.subr.bf16.mxu0 0
      %1217 = vmatpush1.bf16.msra.mxu0 %v708
      %1218 = vmatprep.subr.bf16.mxu0 0
      %1219 = vmatpush1.bf16.msra.mxu0 %v711
      %1220 = vmatprep.subr.bf16.mxu0 0
      %1221 = vmatpush1.bf16.msra.mxu0 %v714
      %1222 = vmatprep.subr.bf16.mxu0 0
      %1223 = vmatpush1.bf16.msra.mxu0 %v717
      %1224 = vmatprep.subr.bf16.mxu0 0
      %1225 = vmatpush1.bf16.msra.mxu0 0
      %1226 = vmatprep.subr.bf16.mxu0 0
      %1227 = vmatpush1.bf16.msra.mxu0 0
      %1228 = vmatprep.subr.bf16.mxu0 0
      %1229 = vmatpush1.bf16.msra.mxu0 0
      %1230 = vmatprep.subr.bf16.mxu0 0
      %1231 = vmatpush1.bf16.msra.mxu0 0
      %1232 = vmatprep.subr.bf16.mxu0 0
      %1233 = vmatpush1.bf16.msra.mxu0 0
      %1234 = vmatprep.subr.bf16.mxu0 0
      %1235 = vmatpush1.bf16.msra.mxu0 0
      %1236 = vmatprep.subr.bf16.mxu0 0
      %1237 = vmatpush1.bf16.msra.mxu0 0
      %1238 = vmatprep.subr.bf16.mxu0 0
      %1239 = vmatpush1.bf16.msra.mxu0 0
      %1240 = vmatprep.mubr.bf16.mxu0 0
      %1241 = vmatmul.mubr.bf16.gmra.mrb[0].mxu0 %v1152
      %v1242 = vpop.f32.mrb[0].mxu0
      %v1243 = vadd.f32 0.0, %v1242
      %v1244 = vpop.f32.mrb[0].mxu0
      %v1245 = vpop.f32.mrb[0].mxu0
      %v1246 = vadd.f32 0.0, %v1245
      %v1247 = vpop.f32.mrb[0].mxu0
      %1248 = vdwg.mxu0
      %v1249 = vadd.f32 %v1159, %v1200
      %v1250 = vadd.f32 %v1162, %v1204
      %v1251 = vxor.u32 %v1249, 2147483648
      %v1252 = vxor.u32 %v1250, 2147483648
      %v1253 = vmul.f32 %v1251, 1.442695
      %v1254 = vpow.pop %v1253
      %v1255 = vmul.f32 %v1252, 1.442695
      %v1256 = vpow.pop %v1255
      %v1257 = vadd.f32 %v1254, 1.0
      %v1258 = vadd.f32 %v1256, 1.0
      %v1259 = vrcp.pop %v1257
      %v1260 = vmul.f32 1.0, %v1259
      %v1261 = vrcp.pop %v1258
      %v1262 = vmul.f32 1.0, %v1261
      %v1263 = vadd.f32 %v1160, %v1202
      %v1264 = vadd.f32 %v1163, %v1206
      %v1265 = vxor.u32 %v1263, 2147483648
      %v1266 = vxor.u32 %v1264, 2147483648
      %v1267 = vmul.f32 %v1265, 1.442695
      %v1268 = vpow.pop %v1267
      %v1269 = vmul.f32 %v1266, 1.442695
      %v1270 = vpow.pop %v1269
      %v1271 = vadd.f32 %v1268, 1.0
      %v1272 = vadd.f32 %v1270, 1.0
      %v1273 = vrcp.pop %v1271
      %v1274 = vmul.f32 1.0, %v1273
      %v1275 = vrcp.pop %v1272
      %v1276 = vmul.f32 1.0, %v1275
      %v1277 = vadd.f32 %v1243, %v597
      %v1278 = vadd.f32 %v1246, %v597
      %v1279 = vmul.f32 %v1260, %v1277
      %v1280 = vmul.f32 %v1262, %v1278
      %v1281 = vadd.f32 %v1161, %v1279
      %v1282 = vadd.f32 %v1164, %v1280
      %v1283 = vtanh.pop %v1281
      %v1284 = vtanh.pop %v1282
      %v1285 = vsub.f32 1.0, %v1274
      %v1286 = vsub.f32 1.0, %v1276
      %v1287 = vmul.f32 %v1285, %v1283
      %v1288 = vmul.f32 %v1286, %v1284
      %v1289 = vmul.f32 %v1274, %v1150
      %v1290 = vmul.f32 %v1276, %v1151
      %v1291 = vadd.f32 %v1287, %v1289
      %v1292 = vadd.f32 %v1288, %v1290
      %v1293 = vpack.c.bf16 %v1292, %v1291
      %1294 = vst [vmem:[#allocation3] sm:$0xff] %v1291
      %1295 = vst [vmem:[#allocation3 + $0x8] sm:$0xff] %v1292
      %p1296 = scmp.eq.s32.totalorder %s23, 1
      // Predicated region
      $region53: #{encoder_rnn_forward.1} parent=47 // pred_check
        %p1297 = pneg %p1296
      $region54: #{encoder_rnn_forward.1} parent=47 // pred_check_branch
        %1299 = sbr.rel (%p1297) target = $region56
      $region55: #{encoder_rnn_forward.1} parent=47 // pred_region
        %v1300 = vld [vmem:[%s5] sm:$0xf]
        %v1301 = vld [vmem:[%s5 + $0x4] sm:$0xf]
        %v1302 = vld [vmem:[%s5 + $0x8] sm:$0xf]
        %v1303 = vld [vmem:[%s5 + $0xc] sm:$0xf]
        %v1304 = vld [vmem:[%s5 + $0x10] sm:$0xf]
        %v1305 = vld [vmem:[%s5 + $0x14] sm:$0xf]
        %v1306 = vld [vmem:[%s5 + $0x18] sm:$0xf]
        %v1307 = vld [vmem:[%s5 + $0x1c] sm:$0xf]
        %v1308 = vld [vmem:[%s5 + $0x20] sm:$0xf]
        %v1309 = vld [vmem:[%s5 + $0x24] sm:$0xf]
        %v1310 = vld [vmem:[%s5 + $0x28] sm:$0xf]
        %v1311 = vld [vmem:[%s5 + $0x2c] sm:$0xf]
        %v1312 = vld [vmem:[%s5 + $0x30] sm:$0xf]
        %v1313 = vld [vmem:[%s5 + $0x34] sm:$0xf]
        %v1314 = vld [vmem:[%s5 + $0x38] sm:$0xf]
        %v1315 = vld [vmem:[%s5 + $0x3c] sm:$0xf]
        %v1316 = vld [vmem:[%s6] sm:$0x1]
        %v1318 = vlaneseq
        %v1319 = vshrl.u32 %v1318, 7
        %v1320 = vsub.s32 0, %v1319
        %v1321 = vrot.slane %v1316, %v1320
        %v1339 = vunpack.c.l.b16 %v1300
        %v1340 = vunpack.c.l.b16 %v1301
        %v1341 = vunpack.c.l.b16 %v1302
        %v1342 = vunpack.c.l.b16 %v1303
        %v1343 = vunpack.c.l.b16 %v1304
        %v1344 = vunpack.c.l.b16 %v1305
        %v1345 = vunpack.c.l.b16 %v1306
        %v1346 = vunpack.c.l.b16 %v1307
        %v1347 = vunpack.c.l.b16 %v1308
        %v1348 = vunpack.c.l.b16 %v1309
        %v1349 = vunpack.c.l.b16 %v1310
        %v1350 = vunpack.c.l.b16 %v1311
        %v1351 = vunpack.c.l.b16 %v1312
        %v1352 = vunpack.c.l.b16 %v1313
        %v1353 = vunpack.c.l.b16 %v1314
        %v1354 = vunpack.c.l.b16 %v1315
        %v1355 = vpack.c.b16 %v1340, %v1339
        %v1356 = vpack.c.b16 %v1342, %v1341
        %v1357 = vpack.c.b16 %v1344, %v1343
        %v1358 = vpack.c.b16 %v1346, %v1345
        %v1359 = vpack.c.b16 %v1348, %v1347
        %v1360 = vpack.c.b16 %v1350, %v1349
        %v1361 = vpack.c.b16 %v1352, %v1351
        %v1362 = vpack.c.b16 %v1354, %v1353
        %1371 = vmatprep.subr.bf16.mxu0 0
        %1372 = vmatpush1.bf16.msra.mxu0 %v1355
        %1373 = vmatprep.subr.bf16.mxu0 0
        %1374 = vmatpush1.bf16.msra.mxu0 %v1356
        %1375 = vmatprep.subr.bf16.mxu0 0
        %1376 = vmatpush1.bf16.msra.mxu0 %v1357
        %1377 = vmatprep.subr.bf16.mxu0 0
        %1378 = vmatpush1.bf16.msra.mxu0 %v1358
        %1379 = vmatprep.subr.bf16.mxu0 0
        %1380 = vmatpush1.bf16.msra.mxu0 %v1359
        %1381 = vmatprep.subr.bf16.mxu0 0
        %1382 = vmatpush1.bf16.msra.mxu0 %v1360
        %1383 = vmatprep.subr.bf16.mxu0 0
        %1384 = vmatpush1.bf16.msra.mxu0 %v1361
        %1385 = vmatprep.subr.bf16.mxu0 0
        %1386 = vmatpush1.bf16.msra.mxu0 %v1362
        %1387 = vmatprep.subr.bf16.mxu0 0
        %1388 = vmatpush1.bf16.msra.mxu0 0
        %1389 = vmatprep.subr.bf16.mxu0 0
        %1390 = vmatpush1.bf16.msra.mxu0 0
        %1391 = vmatprep.subr.bf16.mxu0 0
        %1392 = vmatpush1.bf16.msra.mxu0 0
        %1393 = vmatprep.subr.bf16.mxu0 0
        %1394 = vmatpush1.bf16.msra.mxu0 0
        %1395 = vmatprep.subr.bf16.mxu0 0
        %1396 = vmatpush1.bf16.msra.mxu0 0
        %1397 = vmatprep.subr.bf16.mxu0 0
        %1398 = vmatpush1.bf16.msra.mxu0 0
        %1399 = vmatprep.subr.bf16.mxu0 0
        %1400 = vmatpush1.bf16.msra.mxu0 0
        %1401 = vmatprep.subr.bf16.mxu0 0
        %1402 = vmatpush1.bf16.msra.mxu0 0
        %1403 = vmatprep.mubr.bf16.mxu0 0
        %1404 = vmatmul.mubr.bf16.gmra.mrb[0].mxu0 %v1293
        %v1405 = vpop.f32.mrb[0].mxu0
        %v1406 = vadd.f32 %v1321, %v1405
        %v1407 = vpop.f32.mrb[0].mxu0
        %v1408 = vpop.f32.mrb[0].mxu0
        %v1409 = vadd.f32 %v1321, %v1408
        %v1410 = vpop.f32.mrb[0].mxu0
        %1411 = vdwg.mxu0
        %1412 = vst [vmem:[%s311] sm:$0xff] %v1406
        %1413 = vst [vmem:[%s311 + $0x8] sm:$0xff] %v1409
      $region56: #{encoder_rnn_forward.1} parent=47 // pred_fallthru
        _
      %s1414 = smul.u32 2, %s22
      %p1415 = scmp.lt.s32.totalorder %s1414, 1
      %s1416 = scalar_select %p1415, %s1414, 1
      %s1417 = smul.addr %s1416, 8
      %s1418 = scalar_lea.vmem %s7, %s1417
      // Predicated region
      $region57: #{encoder_rnn_forward.1} parent=47 // pred_check
        %p1419 = pneg %p202
      $region58: #{encoder_rnn_forward.1} parent=47 // pred_check_branch
        %1421 = sbr.rel (%p1419) target = $region60
      $region59: #{encoder_rnn_forward.1} parent=47 // pred_region
        %s1422 = smul.u32 2, %s22
      $region60: #{encoder_rnn_forward.1} parent=47 // pred_fallthru
        _
      // Predicated region
      $region61: #{encoder_rnn_forward.1} parent=47 // pred_check
        %p1423 = pneg %p202
      $region62: #{encoder_rnn_forward.1} parent=47 // pred_check_branch
        %1425 = sbr.rel (%p1423) target = $region64
      $region63: #{encoder_rnn_forward.1} parent=47 // pred_region
        %s1426 = smul.u32 2, %s22
        %p1427 = scmp.lt.s32.totalorder %s1426, 1
        %s1428 = scalar_select %p1427, %s1426, 1
        %s1429 = smul.addr %s1428, 8
        %s1430 = scalar_lea.vmem %s7, %s1429
      $region64: #{encoder_rnn_forward.1} parent=47 // pred_fallthru
        _
    $region48: #{encoder_rnn_forward.1} parent=5 // pred_fallthru
      _
    %p1431 = scmp.le.s32.totalorder 2, %s13
    // Predicated region
    $region65: #{encoder_rnn_forward.1} parent=5 // pred_check
      %p1432 = pneg %p1431
    $region66: #{encoder_rnn_forward.1} parent=5 // pred_check_branch
      %1434 = sbr.rel (%p1432) target = $region68
    $region67: #{encoder_rnn_forward.1} parent=5 // pred_region
      %s1435 = ssub.s32 %s13, 2
    $region68: #{encoder_rnn_forward.1} parent=5 // pred_fallthru
      _
  $region6: #{encoder_rnn_forward.1} parent=0 // loop_footer
    %s17 = sadd.s32 1, %s13
  $region7: #{encoder_rnn_forward.1} parent=0 // loop_footer_branch
    %12 = sbr.rel target = $region3
  $region8: #{encoder_rnn_forward.1} parent=0 // loop_exit
    _

</llo_original>
